<compile_context>
chip_gen: v5e
topology: v5e:2x2
jax: 0.10.0
libtpu: 0.0.40
codegen_flags: <defaults>
</compile_context>

<pallas_src>
import functools

import jax
import jax.numpy as jnp
from jax.experimental import pallas as pl
from jax.experimental.pallas import tpu as pltpu


MATMUL_DTYPE = jnp.bfloat16  # MXU operand dtype; accumulation is always f32.


# ----------------------------------------------------------------------------
# Kernel
# ----------------------------------------------------------------------------
def _layer_norm(h, g, b, eps):
    mean = jnp.mean(h, axis=-1, keepdims=True)
    var = jnp.mean(jnp.square(h - mean), axis=-1, keepdims=True)
    return (h - mean) * jax.lax.rsqrt(var + eps) * g + b


def _decoder_stack_kernel(x_ref, wqkv_ref, bqkv_ref, wo_ref, bo_ref,
                          ln1_g_ref, ln1_b_ref, w1_ref, b1_ref, w2_ref, b2_ref,
                          ln2_g_ref, ln2_b_ref, o_ref, h_ref, *,
                          bt: int, s: int, d: int, eps: float):
    """One post-LN transformer block for a (bt, s, d) batch tile; layer index = grid axis 1.

    Residual stream h_ref (VMEM scratch, (bt*s, d) f32) persists across the L axis:
      l == 0          : h <- x
      every l         : h <- LN2( LN1(h + attn(h)) + FFN(LN1(h + attn(h))) )
      l == nlayers-1  : o <- h
    """
    l = pl.program_id(1)
    m = bt * s

    @pl.when(l == 0)
    def _():
        h_ref[...] = x_ref[...].reshape(m, d)

    x = h_ref[...]                                   # (M, D) f32 residual stream
    x16 = x.astype(MATMUL_DTYPE)

    # --- fused QKV projection: one (M,D) x (D,3D) MXU pass; scale pre-folded into Q cols ---
    qkv = (jnp.dot(x16, wqkv_ref[0], preferred_element_type=jnp.float32)
           .astype(MATMUL_DTYPE) + bqkv_ref[0])      # (M, 3D) bf16
    q = qkv[:, :d].reshape(bt, s, d)
    k = qkv[:, d:2 * d].reshape(bt, s, d)
    v = qkv[:, 2 * d:].reshape(bt, s, d)

    # --- single-head scaled dot-product attention, batched over the Bt axis (non-causal) ---
    # TODO(synk): add a causal mask here if the original attn_factory is causal.
    # TODO(synk): KV-tile with an online softmax before scaling S (dense (S,S) f32 will not
    #             fit v7x's 64 MiB VMEM at production sequence lengths).
    sc = jnp.einsum('bqd,bkd->bqk', q, k, preferred_element_type=jnp.float32)  # (Bt,S,S)
    mx = jnp.max(sc, axis=-1, keepdims=True)
    p = jnp.exp(sc - mx)
    p = (p * pl.reciprocal(jnp.sum(p, axis=-1, keepdims=True), approx=True)
         ).astype(MATMUL_DTYPE)
    ctx = jnp.einsum('bqk,bkd->bqd', p, v,
                     preferred_element_type=jnp.float32).reshape(m, d)          # (M, D)

    attn = jnp.dot(ctx.astype(MATMUL_DTYPE), wo_ref[0],
                   preferred_element_type=jnp.float32) + bo_ref[0]

    # --- post-LN residual 1 ---
    h1 = _layer_norm(x + attn, ln1_g_ref[0], ln1_b_ref[0], eps)

    # --- feed-forward (Linear -> ReLU -> Linear); Dropout(eval) == identity ---
    ff = jnp.dot(h1.astype(MATMUL_DTYPE), w1_ref[0],
                 preferred_element_type=jnp.float32) + b1_ref[0]
    ff = jnp.maximum(ff, 0.0)
    ff = jnp.dot(ff.astype(MATMUL_DTYPE), w2_ref[0],
                 preferred_element_type=jnp.float32) + b2_ref[0]

    # --- post-LN residual 2 ---
    h2 = _layer_norm(h1 + ff, ln2_g_ref[0], ln2_b_ref[0], eps)
    h_ref[...] = h2

    @pl.when(l == pl.num_programs(1) - 1)
    def _():
        o_ref[...] = h2.reshape(bt, s, d)


# ----------------------------------------------------------------------------
# Wrapper
# ----------------------------------------------------------------------------
def _pick_batch_tile(b, s, target_rows=256, max_rows=1024):
    """Largest divisor Bt of B with Bt*S <= max_rows, stopping once Bt*S >= target_rows."""
    best = 1
    for bt in range(1, b + 1):
        if b % bt == 0 and bt * s <= max_rows:
            best = bt
            if bt * s >= target_rows:
                break
    return best


def decoder_stack(x, layers, *, eps: float = 1e-5):
    """All nlayers transformer blocks in a single fused pallas_call."""
    B, S, D = x.shape
    L, _, P = layers["ff1_w"].shape
    Bt = _pick_batch_tile(B, S)
    nb = B // Bt

    # Cost over the whole grid (nb batch tiles x L layers).
    flops = L * B * (2 * S * D * 3 * D      # qkv
                     + 2 * S * S * D        # scores
                     + 2 * S * S * D        # ctx
                     + 2 * S * D * D        # out proj
                     + 2 * S * D * P        # ffn1
                     + 2 * S * P * D)       # ffn2
    transcendentals = L * B * (S * S + 4 * S)
    weight_bytes = 2 * (3 * D * D + D * D + D * P + P * D) + 4 * (3 * D + 6 * D + P)
    bytes_acc = 2 * B * S * D * 4 + nb * L * weight_bytes

    def wspec(d1, d2):
        return pl.BlockSpec((1, d1, d2), lambda b, l: (l, 0, 0))

    kernel = functools.partial(_decoder_stack_kernel, bt=Bt, s=S, d=D, eps=eps)
    return pl.pallas_call(
        kernel,
        out_shape=jax.ShapeDtypeStruct((B, S, D), jnp.float32),
        grid=(nb, L),
        in_specs=[
            pl.BlockSpec((Bt, S, D), lambda b, l: (b, 0, 0)),   # activations (read at l==0)
            wspec(D, 3 * D), wspec(1, 3 * D),                   # wqkv, bqkv (bf16)
            wspec(D, D), wspec(1, D),                           # wo, bo
            wspec(1, D), wspec(1, D),                           # ln1 gamma/beta
            wspec(D, P), wspec(1, P),                           # ff1
            wspec(P, D), wspec(1, D),                           # ff2
            wspec(1, D), wspec(1, D),                           # ln2 gamma/beta
        ],
        out_specs=pl.BlockSpec((Bt, S, D), lambda b, l: (b, 0, 0)),
        scratch_shapes=[pltpu.VMEM((Bt * S, D), jnp.float32)],  # resident residual stream
        compiler_params=pltpu.CompilerParams(
            dimension_semantics=("parallel", "arbitrary")),
        cost_estimate=pl.CostEstimate(flops=flops, transcendentals=transcendentals,
                                      bytes_accessed=bytes_acc),
    )(x,
      layers["wqkv"], layers["bqkv"],
      layers["wo"], layers["bo"],
      layers["ln1_g"], layers["ln1_b"],
      layers["ff1_w"], layers["ff1_b"],
      layers["ff2_w"], layers["ff2_b"],
      layers["ln2_g"], layers["ln2_b"])


# ----------------------------------------------------------------------------
# Parameter construction (deterministic, PyTorch-Linear-style uniform init)
# ----------------------------------------------------------------------------
def _linear_params(key, fan_in, fan_out, w_dtype=MATMUL_DTYPE):
    kw, kb = jax.random.split(key)
    bound = 1.0 / float(fan_in) ** 0.5
    w = jax.random.uniform(kw, (fan_in, fan_out), jnp.float32, -bound, bound)
    b = jax.random.uniform(kb, (fan_out,), jnp.float32, -bound, bound)
    return w.astype(w_dtype), b


def sinusoidal_pe(max_len, d):
    pos = jnp.arange(max_len, dtype=jnp.float32)[:, None]
    i = jnp.arange(d // 2, dtype=jnp.float32)[None, :]
    angle = pos / jnp.power(10000.0, 2.0 * i / d)
    pe = jnp.zeros((max_len, d), jnp.float32)
    pe = pe.at[:, 0::2].set(jnp.sin(angle))
    pe = pe.at[:, 1::2].set(jnp.cos(angle))
    return pe


def make_params(key, *, input_size, d_k, proj_dim, nlayers, max_seq_len):
    keys = jax.random.split(key, 2 + 6 * nlayers)
    params = {}
    # Embedding projections stay f32 and are handled by XLA (lane-sparse F dim).
    params["emb1_w"], params["emb1_b"] = _linear_params(keys[0], input_size, d_k,
                                                        w_dtype=jnp.float32)
    params["emb2_w"], params["emb2_b"] = _linear_params(keys[1], d_k, input_size,
                                                        w_dtype=jnp.float32)
    params["pe"] = sinusoidal_pe(max_seq_len, d_k)

    scale = 1.0 / float(d_k) ** 0.5
    per_layer = []
    ki = 2
    for _ in range(nlayers):
        blk = {}
        wq, bq = _linear_params(keys[ki + 0], d_k, d_k, w_dtype=jnp.float32)
        wk, bk = _linear_params(keys[ki + 1], d_k, d_k, w_dtype=jnp.float32)
        wv, bv = _linear_params(keys[ki + 2], d_k, d_k, w_dtype=jnp.float32)
        # Packed QKV weight; 1/sqrt(d_k) folded into the Q columns (exact, deletes a VPU mul).
        blk["wqkv"] = jnp.concatenate([wq * scale, wk, wv], axis=1).astype(MATMUL_DTYPE)
        blk["bqkv"] = jnp.concatenate([bq * scale, bk, bv], axis=0
                                      ).reshape(1, 3 * d_k).astype(MATMUL_DTYPE)
        wo, bo = _linear_params(keys[ki + 3], d_k, d_k)
        blk["wo"], blk["bo"] = wo, bo.reshape(1, d_k)
        w1, b1 = _linear_params(keys[ki + 4], d_k, proj_dim)
        blk["ff1_w"], blk["ff1_b"] = w1, b1.reshape(1, proj_dim)
        w2, b2 = _linear_params(keys[ki + 5], proj_dim, d_k)
        blk["ff2_w"], blk["ff2_b"] = w2, b2.reshape(1, d_k)
        blk["ln1_g"] = jnp.ones((1, d_k), jnp.float32)
        blk["ln1_b"] = jnp.zeros((1, d_k), jnp.float32)
        blk["ln2_g"] = jnp.ones((1, d_k), jnp.float32)
        blk["ln2_b"] = jnp.zeros((1, d_k), jnp.float32)
        per_layer.append(blk)
        ki += 6
    # Stack each parameter across layers -> leading L axis, pipelined along grid axis 1.
    params["layers"] = {name: jnp.stack([blk[name] for blk in per_layer])
                        for name in per_layer[0]}
    return params


# ----------------------------------------------------------------------------
# Forward pass: exactly ONE pallas_call for the whole block stack.
# ----------------------------------------------------------------------------
def transformer_decoder_forward(x, params):
    _, S, _ = x.shape
    # embedding_proj1 + additive positional embedding (left to XLA: F is lane-sparse).
    h = (jnp.einsum('bsf,fd->bsd', x, params["emb1_w"])
         + params["emb1_b"] + params["pe"][None, :S])
    # block.init_keys(x) then block(x): K/V and Q all come from the block input -> SDPA(h).
    h = decoder_stack(h, params["layers"])
    # embedding_proj2.
    return jnp.einsum('bsd,df->bsf', h, params["emb2_w"]) + params["emb2_b"]


if __name__ == "__main__":
    # Small config consistent with the module's __init__ shapes; feature dims picked
    # lane-dense (multiples of 128) for full MXU column use and unmasked stores.
    B, S = 2, 8
    INPUT_SIZE = 16
    D_K = 128
    PROJ_DIM = 256
    NLAYERS = 2
    MAX_SEQ_LEN = 16

    key = jax.random.PRNGKey(0)
    kx, kp = jax.random.split(key)
    x = jax.random.normal(kx, (B, S, INPUT_SIZE), jnp.float32)
    params = make_params(kp, input_size=INPUT_SIZE, d_k=D_K, proj_dim=PROJ_DIM,
                         nlayers=NLAYERS, max_seq_len=MAX_SEQ_LEN)

    fwd = jax.jit(transformer_decoder_forward)
    out = jax.block_until_ready(fwd(x, params))
    assert out.shape == (B, S, INPUT_SIZE)
    print("KERNEL_OK")
</pallas_src>

<mosaic_0001>
module attributes {stable_mosaic.version = 11 : i64} {
  func.func @_decoder_stack_kernel(%arg0: i32, %arg1: i32, %arg2: memref<2x8x128xf32, #tpu.memory_space<vmem>>, %arg3: memref<1x128x384xbf16, #tpu.memory_space<vmem>>, %arg4: memref<1x1x384xbf16, #tpu.memory_space<vmem>>, %arg5: memref<1x128x128xbf16, #tpu.memory_space<vmem>>, %arg6: memref<1x1x128xf32, #tpu.memory_space<vmem>>, %arg7: memref<1x1x128xf32, #tpu.memory_space<vmem>>, %arg8: memref<1x1x128xf32, #tpu.memory_space<vmem>>, %arg9: memref<1x128x256xbf16, #tpu.memory_space<vmem>>, %arg10: memref<1x1x256xf32, #tpu.memory_space<vmem>>, %arg11: memref<1x256x128xbf16, #tpu.memory_space<vmem>>, %arg12: memref<1x1x128xf32, #tpu.memory_space<vmem>>, %arg13: memref<1x1x128xf32, #tpu.memory_space<vmem>>, %arg14: memref<1x1x128xf32, #tpu.memory_space<vmem>>, %arg15: memref<2x8x128xf32, #tpu.memory_space<vmem>>, %arg16: memref<16x128xf32, #tpu.memory_space<vmem>>) attributes {dimension_semantics = [#tpu.dimension_semantics<parallel>, #tpu.dimension_semantics<arbitrary>], iteration_bounds = array<i64: 1, 2>, scalar_prefetch = 0 : i64, scratch_operands = 1 : i64, tpu.core_type = #tpu.core_type<tc>, window_params = [{transform_indices = @transform_0, window_bounds = array<i64: 2, 8, 128>}, {transform_indices = @transform_1, window_bounds = array<i64: 1, 128, 384>}, {transform_indices = @transform_2, window_bounds = array<i64: 1, 1, 384>}, {transform_indices = @transform_3, window_bounds = array<i64: 1, 128, 128>}, {transform_indices = @transform_4, window_bounds = array<i64: 1, 1, 128>}, {transform_indices = @transform_5, window_bounds = array<i64: 1, 1, 128>}, {transform_indices = @transform_6, window_bounds = array<i64: 1, 1, 128>}, {transform_indices = @transform_7, window_bounds = array<i64: 1, 128, 256>}, {transform_indices = @transform_8, window_bounds = array<i64: 1, 1, 256>}, {transform_indices = @transform_9, window_bounds = array<i64: 1, 256, 128>}, {transform_indices = @transform_10, window_bounds = array<i64: 1, 1, 128>}, {transform_indices = @transform_11, window_bounds = array<i64: 1, 1, 128>}, {transform_indices = @transform_12, window_bounds = array<i64: 1, 1, 128>}, {transform_indices = @transform_13, window_bounds = array<i64: 2, 8, 128>}]} {
    %c0_i32 = arith.constant 0 : i32
    %0 = arith.cmpi eq, %arg1, %c0_i32 : i32
    %1 = arith.extui %0 : i1 to i32
    %c0_i32_0 = arith.constant 0 : i32
    %2 = arith.cmpi ne, %1, %c0_i32_0 : i32
    scf.if %2 {
      %c0_59 = arith.constant 0 : index
      %c0_60 = arith.constant 0 : index
      %c0_61 = arith.constant 0 : index
      %117 = vector.load %arg2[%c0_59, %c0_60, %c0_61] : memref<2x8x128xf32, #tpu.memory_space<vmem>>, vector<2x8x128xf32>
      %118 = vector.shape_cast %117 : vector<2x8x128xf32> to vector<16x128xf32>
      %c0_62 = arith.constant 0 : index
      %c0_63 = arith.constant 0 : index
      %119 = vector.load %arg16[%c0_62, %c0_63] : memref<16x128xf32, #tpu.memory_space<vmem>>, vector<16x128xf32>
      tpu.vector_store %arg16[%c0_62, %c0_63], %118 {strides = array<i32>} : memref<16x128xf32, #tpu.memory_space<vmem>>, vector<16x128xf32>,
    } else {
    }
    %c0 = arith.constant 0 : index
    %c0_1 = arith.constant 0 : index
    %3 = vector.load %arg16[%c0, %c0_1] : memref<16x128xf32, #tpu.memory_space<vmem>>, vector<16x128xf32>
    %4 = arith.truncf %3 : vector<16x128xf32> to vector<16x128xbf16>
    %c0_2 = arith.constant 0 : index
    %c0_3 = arith.constant 0 : index
    %c0_4 = arith.constant 0 : index
    %5 = vector.load %arg3[%c0_2, %c0_3, %c0_4] : memref<1x128x384xbf16, #tpu.memory_space<vmem>>, vector<1x128x384xbf16>
    %6 = vector.shape_cast %5 : vector<1x128x384xbf16> to vector<128x384xbf16>
    %cst = arith.constant dense<0.000000e+00> : vector<16x384xf32>
    %7 = tpu.matmul %4, %6, %cst {dimension_numbers = #tpu.dot_dimension_numbers<[1], [0], [0], [1], [0, 0, 1, 1], [], []>} : vector<16x128xbf16>, vector<128x384xbf16>, vector<16x384xf32> -> vector<16x384xf32>
    %8 = arith.truncf %7 : vector<16x384xf32> to vector<16x384xbf16>
    %c0_5 = arith.constant 0 : index
    %c0_6 = arith.constant 0 : index
    %c0_7 = arith.constant 0 : index
    %9 = vector.load %arg4[%c0_5, %c0_6, %c0_7] : memref<1x1x384xbf16, #tpu.memory_space<vmem>>, vector<1x1x384xbf16>
    %10 = vector.shape_cast %9 : vector<1x1x384xbf16> to vector<1x384xbf16>
    %11 = vector.broadcast %10 : vector<1x384xbf16> to vector<16x384xbf16>
    %12 = arith.addf %8, %11 : vector<16x384xbf16>
    %13 = vector.extract_strided_slice %12 {offsets = [0, 0], sizes = [16, 128], strides = [1, 1]} : vector<16x384xbf16> to vector<16x128xbf16>
    %14 = vector.shape_cast %13 : vector<16x128xbf16> to vector<2x8x128xbf16>
    %15 = vector.extract_strided_slice %12 {offsets = [0, 128], sizes = [16, 128], strides = [1, 1]} : vector<16x384xbf16> to vector<16x128xbf16>
    %16 = vector.shape_cast %15 : vector<16x128xbf16> to vector<2x8x128xbf16>
    %17 = vector.extract_strided_slice %12 {offsets = [0, 256], sizes = [16, 128], strides = [1, 1]} : vector<16x384xbf16> to vector<16x128xbf16>
    %18 = vector.shape_cast %17 : vector<16x128xbf16> to vector<2x8x128xbf16>
    "tpu.trace_start"() <{level = 10 : i32, message = "bqd,bkd->bqk"}> : () -> ()
    %cst_8 = arith.constant dense<0.000000e+00> : vector<2x8x8xf32>
    %19 = tpu.matmul %14, %16, %cst_8 {dimension_numbers = #tpu.dot_dimension_numbers<[2], [2], [1], [1], [0, 0, 0, 1, 1, 1], [0], [0]>} : vector<2x8x128xbf16>, vector<2x8x128xbf16>, vector<2x8x8xf32> -> vector<2x8x8xf32>
    "tpu.trace_stop"() : () -> ()
    %cst_9 = arith.constant dense<0xFF800000> : vector<2x8xf32>
    %20 = vector.multi_reduction <maximumf>, %19, %cst_9 [2] : vector<2x8x8xf32> to vector<2x8xf32>
    %21 = vector.shape_cast %20 : vector<2x8xf32> to vector<2x8x1xf32>
    %22 = vector.broadcast %21 : vector<2x8x1xf32> to vector<2x8x8xf32>
    %23 = arith.subf %19, %22 : vector<2x8x8xf32>
    %24 = math.exp %23 : vector<2x8x8xf32>
    %cst_10 = arith.constant dense<0.000000e+00> : vector<2x8xf32>
    %25 = vector.multi_reduction <add>, %24, %cst_10 [2] : vector<2x8x8xf32> to vector<2x8xf32>
    %26 = vector.shape_cast %25 : vector<2x8xf32> to vector<2x8x1xf32>
    %27 = tpu.reciprocal %26 {approx = true} : vector<2x8x1xf32> -> vector<2x8x1xf32>
    %28 = vector.broadcast %27 : vector<2x8x1xf32> to vector<2x8x8xf32>
    %29 = arith.mulf %24, %28 : vector<2x8x8xf32>
    %30 = arith.truncf %29 : vector<2x8x8xf32> to vector<2x8x8xbf16>
    "tpu.trace_start"() <{level = 10 : i32, message = "bqk,bkd->bqd"}> : () -> ()
    %cst_11 = arith.constant dense<0.000000e+00> : vector<2x8x128xf32>
    %31 = tpu.matmul %30, %18, %cst_11 {dimension_numbers = #tpu.dot_dimension_numbers<[2], [1], [1], [2], [0, 0, 0, 1, 1, 2], [0], [0]>} : vector<2x8x8xbf16>, vector<2x8x128xbf16>, vector<2x8x128xf32> -> vector<2x8x128xf32>
    "tpu.trace_stop"() : () -> ()
    %32 = vector.shape_cast %31 : vector<2x8x128xf32> to vector<16x128xf32>
    %33 = arith.truncf %32 : vector<16x128xf32> to vector<16x128xbf16>
    %c0_12 = arith.constant 0 : index
    %c0_13 = arith.constant 0 : index
    %c0_14 = arith.constant 0 : index
    %34 = vector.load %arg5[%c0_12, %c0_13, %c0_14] : memref<1x128x128xbf16, #tpu.memory_space<vmem>>, vector<1x128x128xbf16>
    %35 = vector.shape_cast %34 : vector<1x128x128xbf16> to vector<128x128xbf16>
    %cst_15 = arith.constant dense<0.000000e+00> : vector<16x128xf32>
    %36 = tpu.matmul %33, %35, %cst_15 {dimension_numbers = #tpu.dot_dimension_numbers<[1], [0], [0], [1], [0, 0, 1, 1], [], []>} : vector<16x128xbf16>, vector<128x128xbf16>, vector<16x128xf32> -> vector<16x128xf32>
    %c0_16 = arith.constant 0 : index
    %c0_17 = arith.constant 0 : index
    %c0_18 = arith.constant 0 : index
    %37 = vector.load %arg6[%c0_16, %c0_17, %c0_18] : memref<1x1x128xf32, #tpu.memory_space<vmem>>, vector<1x1x128xf32>
    %38 = vector.shape_cast %37 : vector<1x1x128xf32> to vector<1x128xf32>
    %39 = vector.broadcast %38 : vector<1x128xf32> to vector<16x128xf32>
    %40 = arith.addf %36, %39 : vector<16x128xf32>
    %41 = arith.addf %3, %40 : vector<16x128xf32>
    %c0_19 = arith.constant 0 : index
    %c0_20 = arith.constant 0 : index
    %c0_21 = arith.constant 0 : index
    %42 = vector.load %arg7[%c0_19, %c0_20, %c0_21] : memref<1x1x128xf32, #tpu.memory_space<vmem>>, vector<1x1x128xf32>
    %43 = vector.shape_cast %42 : vector<1x1x128xf32> to vector<1x128xf32>
    %c0_22 = arith.constant 0 : index
    %c0_23 = arith.constant 0 : index
    %c0_24 = arith.constant 0 : index
    %44 = vector.load %arg8[%c0_22, %c0_23, %c0_24] : memref<1x1x128xf32, #tpu.memory_space<vmem>>, vector<1x1x128xf32>
    %45 = vector.shape_cast %44 : vector<1x1x128xf32> to vector<1x128xf32>
    %cst_25 = arith.constant dense<0.000000e+00> : vector<16xf32>
    %46 = vector.multi_reduction <add>, %41, %cst_25 [1] : vector<16x128xf32> to vector<16xf32>
    %47 = vector.shape_cast %46 : vector<16xf32> to vector<16x1xf32>
    %cst_26 = arith.constant 1.280000e+02 : f32
    %48 = vector.broadcast %cst_26 : f32 to vector<16x1xf32>
    %49 = arith.divf %47, %48 : vector<16x1xf32>
    %50 = vector.broadcast %49 : vector<16x1xf32> to vector<16x128xf32>
    %51 = arith.subf %41, %50 : vector<16x128xf32>
    %52 = arith.mulf %51, %51 : vector<16x128xf32>
    %cst_27 = arith.constant dense<0.000000e+00> : vector<16xf32>
    %53 = vector.multi_reduction <add>, %52, %cst_27 [1] : vector<16x128xf32> to vector<16xf32>
    %54 = vector.shape_cast %53 : vector<16xf32> to vector<16x1xf32>
    %cst_28 = arith.constant 1.280000e+02 : f32
    %55 = vector.broadcast %cst_28 : f32 to vector<16x1xf32>
    %56 = arith.divf %54, %55 : vector<16x1xf32>
    %57 = vector.broadcast %49 : vector<16x1xf32> to vector<16x128xf32>
    %58 = arith.subf %41, %57 : vector<16x128xf32>
    %cst_29 = arith.constant 9.99999974E-6 : f32
    %59 = vector.broadcast %cst_29 : f32 to vector<16x1xf32>
    %60 = arith.addf %56, %59 : vector<16x1xf32>
    %61 = math.rsqrt %60 : vector<16x1xf32>
    %62 = vector.broadcast %61 : vector<16x1xf32> to vector<16x128xf32>
    %63 = arith.mulf %58, %62 : vector<16x128xf32>
    %64 = vector.broadcast %43 : vector<1x128xf32> to vector<16x128xf32>
    %65 = arith.mulf %63, %64 : vector<16x128xf32>
    %66 = vector.broadcast %45 : vector<1x128xf32> to vector<16x128xf32>
    %67 = arith.addf %65, %66 : vector<16x128xf32>
    %68 = arith.truncf %67 : vector<16x128xf32> to vector<16x128xbf16>
    %c0_30 = arith.constant 0 : index
    %c0_31 = arith.constant 0 : index
    %c0_32 = arith.constant 0 : index
    %69 = vector.load %arg9[%c0_30, %c0_31, %c0_32] : memref<1x128x256xbf16, #tpu.memory_space<vmem>>, vector<1x128x256xbf16>
    %70 = vector.shape_cast %69 : vector<1x128x256xbf16> to vector<128x256xbf16>
    %cst_33 = arith.constant dense<0.000000e+00> : vector<16x256xf32>
    %71 = tpu.matmul %68, %70, %cst_33 {dimension_numbers = #tpu.dot_dimension_numbers<[1], [0], [0], [1], [0, 0, 1, 1], [], []>} : vector<16x128xbf16>, vector<128x256xbf16>, vector<16x256xf32> -> vector<16x256xf32>
    %c0_34 = arith.constant 0 : index
    %c0_35 = arith.constant 0 : index
    %c0_36 = arith.constant 0 : index
    %72 = vector.load %arg10[%c0_34, %c0_35, %c0_36] : memref<1x1x256xf32, #tpu.memory_space<vmem>>, vector<1x1x256xf32>
    %73 = vector.shape_cast %72 : vector<1x1x256xf32> to vector<1x256xf32>
    %74 = vector.broadcast %73 : vector<1x256xf32> to vector<16x256xf32>
    %75 = arith.addf %71, %74 : vector<16x256xf32>
    %cst_37 = arith.constant 0.000000e+00 : f32
    %76 = vector.broadcast %cst_37 : f32 to vector<16x256xf32>
    %77 = arith.maximumf %75, %76 : vector<16x256xf32>
    %78 = arith.truncf %77 : vector<16x256xf32> to vector<16x256xbf16>
    %c0_38 = arith.constant 0 : index
    %c0_39 = arith.constant 0 : index
    %c0_40 = arith.constant 0 : index
    %79 = vector.load %arg11[%c0_38, %c0_39, %c0_40] : memref<1x256x128xbf16, #tpu.memory_space<vmem>>, vector<1x256x128xbf16>
    %80 = vector.shape_cast %79 : vector<1x256x128xbf16> to vector<256x128xbf16>
    %cst_41 = arith.constant dense<0.000000e+00> : vector<16x128xf32>
    %81 = tpu.matmul %78, %80, %cst_41 {dimension_numbers = #tpu.dot_dimension_numbers<[1], [0], [0], [1], [0, 0, 1, 1], [], []>} : vector<16x256xbf16>, vector<256x128xbf16>, vector<16x128xf32> -> vector<16x128xf32>
    %c0_42 = arith.constant 0 : index
    %c0_43 = arith.constant 0 : index
    %c0_44 = arith.constant 0 : index
    %82 = vector.load %arg12[%c0_42, %c0_43, %c0_44] : memref<1x1x128xf32, #tpu.memory_space<vmem>>, vector<1x1x128xf32>
    %83 = vector.shape_cast %82 : vector<1x1x128xf32> to vector<1x128xf32>
    %84 = vector.broadcast %83 : vector<1x128xf32> to vector<16x128xf32>
    %85 = arith.addf %81, %84 : vector<16x128xf32>
    %86 = arith.addf %67, %85 : vector<16x128xf32>
    %c0_45 = arith.constant 0 : index
    %c0_46 = arith.constant 0 : index
    %c0_47 = arith.constant 0 : index
    %87 = vector.load %arg13[%c0_45, %c0_46, %c0_47] : memref<1x1x128xf32, #tpu.memory_space<vmem>>, vector<1x1x128xf32>
    %88 = vector.shape_cast %87 : vector<1x1x128xf32> to vector<1x128xf32>
    %c0_48 = arith.constant 0 : index
    %c0_49 = arith.constant 0 : index
    %c0_50 = arith.constant 0 : index
    %89 = vector.load %arg14[%c0_48, %c0_49, %c0_50] : memref<1x1x128xf32, #tpu.memory_space<vmem>>, vector<1x1x128xf32>
    %90 = vector.shape_cast %89 : vector<1x1x128xf32> to vector<1x128xf32>
    %cst_51 = arith.constant dense<0.000000e+00> : vector<16xf32>
    %91 = vector.multi_reduction <add>, %86, %cst_51 [1] : vector<16x128xf32> to vector<16xf32>
    %92 = vector.shape_cast %91 : vector<16xf32> to vector<16x1xf32>
    %cst_52 = arith.constant 1.280000e+02 : f32
    %93 = vector.broadcast %cst_52 : f32 to vector<16x1xf32>
    %94 = arith.divf %92, %93 : vector<16x1xf32>
    %95 = vector.broadcast %94 : vector<16x1xf32> to vector<16x128xf32>
    %96 = arith.subf %86, %95 : vector<16x128xf32>
    %97 = arith.mulf %96, %96 : vector<16x128xf32>
    %cst_53 = arith.constant dense<0.000000e+00> : vector<16xf32>
    %98 = vector.multi_reduction <add>, %97, %cst_53 [1] : vector<16x128xf32> to vector<16xf32>
    %99 = vector.shape_cast %98 : vector<16xf32> to vector<16x1xf32>
    %cst_54 = arith.constant 1.280000e+02 : f32
    %100 = vector.broadcast %cst_54 : f32 to vector<16x1xf32>
    %101 = arith.divf %99, %100 : vector<16x1xf32>
    %102 = vector.broadcast %94 : vector<16x1xf32> to vector<16x128xf32>
    %103 = arith.subf %86, %102 : vector<16x128xf32>
    %cst_55 = arith.constant 9.99999974E-6 : f32
    %104 = vector.broadcast %cst_55 : f32 to vector<16x1xf32>
    %105 = arith.addf %101, %104 : vector<16x1xf32>
    %106 = math.rsqrt %105 : vector<16x1xf32>
    %107 = vector.broadcast %106 : vector<16x1xf32> to vector<16x128xf32>
    %108 = arith.mulf %103, %107 : vector<16x128xf32>
    %109 = vector.broadcast %88 : vector<1x128xf32> to vector<16x128xf32>
    %110 = arith.mulf %108, %109 : vector<16x128xf32>
    %111 = vector.broadcast %90 : vector<1x128xf32> to vector<16x128xf32>
    %112 = arith.addf %110, %111 : vector<16x128xf32>
    %c0_56 = arith.constant 0 : index
    %c0_57 = arith.constant 0 : index
    %113 = vector.load %arg16[%c0_56, %c0_57] : memref<16x128xf32, #tpu.memory_space<vmem>>, vector<16x128xf32>
    tpu.vector_store %arg16[%c0_56, %c0_57], %112 {strides = array<i32>} : memref<16x128xf32, #tpu.memory_space<vmem>>, vector<16x128xf32>,
    %c1_i32 = arith.constant 1 : i32
    %114 = arith.cmpi eq, %arg1, %c1_i32 : i32
    %115 = arith.extui %114 : i1 to i32
    %c0_i32_58 = arith.constant 0 : i32
    %116 = arith.cmpi ne, %115, %c0_i32_58 : i32
    scf.if %116 {
      %117 = vector.shape_cast %112 : vector<16x128xf32> to vector<2x8x128xf32>
      %c0_59 = arith.constant 0 : index
      %c0_60 = arith.constant 0 : index
      %c0_61 = arith.constant 0 : index
      %118 = vector.load %arg15[%c0_59, %c0_60, %c0_61] : memref<2x8x128xf32, #tpu.memory_space<vmem>>, vector<2x8x128xf32>
      tpu.vector_store %arg15[%c0_59, %c0_60, %c0_61], %117 {strides = array<i32>} : memref<2x8x128xf32, #tpu.memory_space<vmem>>, vector<2x8x128xf32>,
    } else {
    }
    return
  }
  func.func @transform_0(%arg0: i32, %arg1: i32) -> (i32, i32, i32) {
    %c0_i32 = arith.constant 0 : i32
    %c0_i32_0 = arith.constant 0 : i32
    %c0_i32_1 = arith.constant 0 : i32
    return %arg0, %c0_i32, %c0_i32_0 : i32, i32, i32
  }
  func.func @transform_1(%arg0: i32, %arg1: i32) -> (i32, i32, i32) {
    %c0_i32 = arith.constant 0 : i32
    %c0_i32_0 = arith.constant 0 : i32
    %c0_i32_1 = arith.constant 0 : i32
    return %arg1, %c0_i32, %c0_i32_0 : i32, i32, i32
  }
  func.func @transform_2(%arg0: i32, %arg1: i32) -> (i32, i32, i32) {
    %c0_i32 = arith.constant 0 : i32
    %c0_i32_0 = arith.constant 0 : i32
    %c0_i32_1 = arith.constant 0 : i32
    return %arg1, %c0_i32, %c0_i32_0 : i32, i32, i32
  }
  func.func @transform_3(%arg0: i32, %arg1: i32) -> (i32, i32, i32) {
    %c0_i32 = arith.constant 0 : i32
    %c0_i32_0 = arith.constant 0 : i32
    %c0_i32_1 = arith.constant 0 : i32
    return %arg1, %c0_i32, %c0_i32_0 : i32, i32, i32
  }
  func.func @transform_4(%arg0: i32, %arg1: i32) -> (i32, i32, i32) {
    %c0_i32 = arith.constant 0 : i32
    %c0_i32_0 = arith.constant 0 : i32
    %c0_i32_1 = arith.constant 0 : i32
    return %arg1, %c0_i32, %c0_i32_0 : i32, i32, i32
  }
  func.func @transform_5(%arg0: i32, %arg1: i32) -> (i32, i32, i32) {
    %c0_i32 = arith.constant 0 : i32
    %c0_i32_0 = arith.constant 0 : i32
    %c0_i32_1 = arith.constant 0 : i32
    return %arg1, %c0_i32, %c0_i32_0 : i32, i32, i32
  }
  func.func @transform_6(%arg0: i32, %arg1: i32) -> (i32, i32, i32) {
    %c0_i32 = arith.constant 0 : i32
    %c0_i32_0 = arith.constant 0 : i32
    %c0_i32_1 = arith.constant 0 : i32
    return %arg1, %c0_i32, %c0_i32_0 : i32, i32, i32
  }
  func.func @transform_7(%arg0: i32, %arg1: i32) -> (i32, i32, i32) {
    %c0_i32 = arith.constant 0 : i32
    %c0_i32_0 = arith.constant 0 : i32
    %c0_i32_1 = arith.constant 0 : i32
    return %arg1, %c0_i32, %c0_i32_0 : i32, i32, i32
  }
  func.func @transform_8(%arg0: i32, %arg1: i32) -> (i32, i32, i32) {
    %c0_i32 = arith.constant 0 : i32
    %c0_i32_0 = arith.constant 0 : i32
    %c0_i32_1 = arith.constant 0 : i32
    return %arg1, %c0_i32, %c0_i32_0 : i32, i32, i32
  }
  func.func @transform_9(%arg0: i32, %arg1: i32) -> (i32, i32, i32) {
    %c0_i32 = arith.constant 0 : i32
    %c0_i32_0 = arith.constant 0 : i32
    %c0_i32_1 = arith.constant 0 : i32
    return %arg1, %c0_i32, %c0_i32_0 : i32, i32, i32
  }
  func.func @transform_10(%arg0: i32, %arg1: i32) -> (i32, i32, i32) {
    %c0_i32 = arith.constant 0 : i32
    %c0_i32_0 = arith.constant 0 : i32
    %c0_i32_1 = arith.constant 0 : i32
    return %arg1, %c0_i32, %c0_i32_0 : i32, i32, i32
  }
  func.func @transform_11(%arg0: i32, %arg1: i32) -> (i32, i32, i32) {
    %c0_i32 = arith.constant 0 : i32
    %c0_i32_0 = arith.constant 0 : i32
    %c0_i32_1 = arith.constant 0 : i32
    return %arg1, %c0_i32, %c0_i32_0 : i32, i32, i32
  }
  func.func @transform_12(%arg0: i32, %arg1: i32) -> (i32, i32, i32) {
    %c0_i32 = arith.constant 0 : i32
    %c0_i32_0 = arith.constant 0 : i32
    %c0_i32_1 = arith.constant 0 : i32
    return %arg1, %c0_i32, %c0_i32_0 : i32, i32, i32
  }
  func.func @transform_13(%arg0: i32, %arg1: i32) -> (i32, i32, i32) {
    %c0_i32 = arith.constant 0 : i32
    %c0_i32_0 = arith.constant 0 : i32
    %c0_i32_1 = arith.constant 0 : i32
    return %arg0, %c0_i32, %c0_i32_0 : i32, i32, i32
  }
}

</mosaic_0001>

<llo_original>
// kernel: transformer_decoder_forward.1
$region0: #{transformer_decoder_forward.1}
  #allocation0 [shape = 'u32[]', space=smem, size = 0x4, offset = 0x4, fixed_abs, tag = 'smem constant byte address 0x4 - core index']
  #allocation1 [shape = 'u32[72,128]{1,0:T(1,128)}', space=vmem, size = 0x9000, scoped, tag = 'internal scratch']
  #allocation2 [shape = 'f32[16,128]{1,0:T(8,128)}', space=vmem, size = 0x2000, scoped, tag = 'scratch operand']
  %s0 = inlined_call_operand.vmem [shape: f32[2,8,128], index: 0, kind: input, shape index: {}]
  %s1 = inlined_call_operand.hbm [shape: bf16[2,128,384], index: 1, kind: input, shape index: {}]
  %s2 = inlined_call_operand.vmem [shape: bf16[2,1,384], index: 2, kind: input, shape index: {}]
  %s3 = inlined_call_operand.hbm [shape: bf16[2,128,128], index: 3, kind: input, shape index: {}]
  %s4 = inlined_call_operand.vmem [shape: f32[2,1,128], index: 4, kind: input, shape index: {}]
  %s5 = inlined_call_operand.vmem [shape: f32[2,1,128], index: 5, kind: input, shape index: {}]
  %s6 = inlined_call_operand.vmem [shape: f32[2,1,128], index: 6, kind: input, shape index: {}]
  %s7 = inlined_call_operand.hbm [shape: bf16[2,128,256], index: 7, kind: input, shape index: {}]
  %s8 = inlined_call_operand.vmem [shape: f32[2,1,256], index: 8, kind: input, shape index: {}]
  %s9 = inlined_call_operand.hbm [shape: bf16[2,256,128], index: 9, kind: input, shape index: {}]
  %s10 = inlined_call_operand.vmem [shape: f32[2,1,128], index: 10, kind: input, shape index: {}]
  %s11 = inlined_call_operand.vmem [shape: f32[2,1,128], index: 11, kind: input, shape index: {}]
  %s12 = inlined_call_operand.vmem [shape: f32[2,1,128], index: 12, kind: input, shape index: {}]
  %s13 = inlined_call_operand.vmem [shape: f32[2,8,128], index: 13, kind: output, shape index: {}]
  %s14 = sld [smem:[#allocation0]]
  $region109: #{transformer_decoder_forward.1} parent=0
    _
  %s16 = ssub.s32 1, %s14
  %s17 = scalar_select 0, %s16, %s14
  $region1: #{transformer_decoder_forward.1} parent=0
    #allocation3 [shape = 'u8[196608]{0}', space=vmem, size = 0x30000, scoped, tag = 'input window, operand 1']
    #allocation4 [shape = 's32[2]{0}', space=sflag, size = 0x8, scoped, tag = 'scoped memory for transformer_decoder_forward.1']
    #allocation5 [shape = 'u8[65536]{0}', space=vmem, size = 0x10000, scoped, tag = 'input window, operand 3']
    #allocation6 [shape = 's32[2]{0}', space=sflag, size = 0x8, scoped, tag = 'scoped memory for transformer_decoder_forward.1']
    #allocation7 [shape = 'u8[131072]{0}', space=vmem, size = 0x20000, scoped, tag = 'input window, operand 7']
    #allocation8 [shape = 'u8[131072]{0}', space=vmem, size = 0x20000, scoped, tag = 'input window, operand 9']
    #allocation9 [shape = 's32[2]{0}', space=sflag, size = 0x8, scoped, tag = 'scoped memory for transformer_decoder_forward.1']
    %18 = vsyncpa [#allocation4], 0
    %s19 = scalar_lea.sflag [#allocation4], 1
    %20 = vsyncpa %s19, 0
    %21 = vsyncpa [#allocation6], 0
    %s22 = scalar_lea.sflag [#allocation6], 1
    %23 = vsyncpa %s22, 0
    %24 = vsyncpa [#allocation9], 0
    %s25 = scalar_lea.sflag [#allocation9], 1
    %26 = vsyncpa %s25, 0
    loop: start=0, step=1, limit=4
    $region2: #{transformer_decoder_forward.1} parent=1 // loop_pre_header
      _
    $region3: #{transformer_decoder_forward.1} parent=1 // loop_header
      %s28 = sphi 0, %s32
      %p29 = scmp.ge.s32.totalorder %s28, 4
      %s35 = sphi 0, %s47
      %s36 = sphi 0, %s43
      %s37 = sphi 0, %s35
      %s38 = sphi 0, %s36
      %s39 = sphi 0, %s37
      %s40 = sphi 0, %s38
      %s50 = sphi 0, %s52
      %s53 = sphi 0, %s50
      %s54 = sphi 0, %s53
      %s70 = sphi 0, %s54
      %s76 = sphi 0, %s78
      %s79 = sphi 0, %s76
      %s80 = sphi 0, %s79
      %s96 = sphi 0, %s80
      %s102 = sphi 0, %s104
      %s105 = sphi 0, %s102
      %s106 = sphi 0, %s105
      %s122 = sphi 0, %s106
      %s128 = sphi 0, %s130
      %s131 = sphi 0, %s128
      %s132 = sphi 0, %s131
      %s148 = sphi 0, %s132
      %s154 = sphi 0, %s156
      %s157 = sphi 0, %s154
      %s158 = sphi 0, %s157
      %s174 = sphi 0, %s158
      %s180 = sphi 0, %s182
      %s183 = sphi 0, %s180
      %s184 = sphi 0, %s183
      %s200 = sphi 0, %s184
      %s206 = sphi 0, %s208
      %s209 = sphi 0, %s206
      %s210 = sphi 0, %s209
      %s226 = sphi 0, %s210
      %s232 = sphi 0, %s234
      %s235 = sphi 0, %s232
      %s236 = sphi 0, %s235
      %s252 = sphi 0, %s236
      %s258 = sphi 0, %s260
      %s261 = sphi 0, %s258
      %s262 = sphi 0, %s261
      %s278 = sphi 0, %s262
      %s284 = sphi 0, %s286
      %s287 = sphi 0, %s284
      %s288 = sphi 0, %s287
      %s304 = sphi 0, %s288
      %s310 = sphi 0, %s312
      %s313 = sphi 0, %s310
      %s314 = sphi 0, %s313
      %s330 = sphi 0, %s314
      %s336 = sphi 0, %s338
      %s339 = sphi 0, %s336
      %s340 = sphi 0, %s339
      %s356 = sphi 0, %s340
      %s362 = sphi 0, %s364
      %s365 = sphi 0, %s362
      %s366 = sphi 0, %s365
      %s382 = sphi 0, %s366
      %s388 = sphi 0, %s390
      %s391 = sphi 0, %s388
      %s392 = sphi 0, %s391
      %s408 = sphi 0, %s392
    $region4: #{transformer_decoder_forward.1} parent=1 // loop_header_branch
      %31 = sbr.rel (%p29) target = $region8
    $region5: #{transformer_decoder_forward.1} parent=1 // loop_body
      %s33 = ssub.s32 %s28, 1
      %s34 = ssub.s32 %s28, 2
      %s41 = sadd.s32 1, %s36
      %p42 = scmp.ge.s32.totalorder %s41, 2
      %s43 = scalar_select %p42, 0, %s41
      %s44 = sadd.s32 1, %s35
      %s45 = scalar_select %p42, %s44, %s35
      %p46 = scmp.ge.s32.totalorder %s45, 1
      %s47 = scalar_select %p46, 0, %s45
      %s48 = ssub.s32 %s35, %s47
      %p49 = scmp.eq.s32.totalorder %s48, 0
      %s51 = sadd.s32 %s50, 1
      %s52 = scalar_select %p49, %s50, %s51
      %p55 = pneg %p49
      %p56 = scmp.eq.s32.totalorder %s28, 1
      %p57 = por %p55, %p56
      %p58 = scmp.ne.s32.totalorder %s50, %s53
      %p59 = scmp.eq.s32.totalorder %s28, 0
      %p60 = por %p58, %p59
      %p61 = scmp.ne.s32.totalorder %s50, %s53
      %p62 = scmp.eq.s32.totalorder %s33, 1
      %p63 = por %p61, %p62
      %p64 = scmp.ne.s32.totalorder %s53, %s54
      %p65 = scmp.eq.s32.totalorder %s33, 0
      %p66 = por %p64, %p65
      %p67 = scmp.ne.s32.totalorder %s53, %s54
      %p68 = scmp.eq.s32.totalorder %s34, 1
      %p69 = por %p67, %p68
      %p71 = scmp.ne.s32.totalorder %s54, %s70
      %p72 = scmp.eq.s32.totalorder %s34, 0
      %p73 = por %p71, %p72
      %s74 = ssub.s32 %s36, %s43
      %p75 = scmp.eq.s32.totalorder %s74, 0
      %s77 = sadd.s32 %s76, 1
      %s78 = scalar_select %p75, %s76, %s77
      %p81 = pneg %p75
      %p82 = scmp.eq.s32.totalorder %s28, 1
      %p83 = por %p81, %p82
      %p84 = scmp.ne.s32.totalorder %s76, %s79
      %p85 = scmp.eq.s32.totalorder %s28, 0
      %p86 = por %p84, %p85
      %p87 = scmp.ne.s32.totalorder %s76, %s79
      %p88 = scmp.eq.s32.totalorder %s33, 1
      %p89 = por %p87, %p88
      %p90 = scmp.ne.s32.totalorder %s79, %s80
      %p91 = scmp.eq.s32.totalorder %s33, 0
      %p92 = por %p90, %p91
      %p93 = scmp.ne.s32.totalorder %s79, %s80
      %p94 = scmp.eq.s32.totalorder %s34, 1
      %p95 = por %p93, %p94
      %p97 = scmp.ne.s32.totalorder %s80, %s96
      %p98 = scmp.eq.s32.totalorder %s34, 0
      %p99 = por %p97, %p98
      %s100 = ssub.s32 %s36, %s43
      %p101 = scmp.eq.s32.totalorder %s100, 0
      %s103 = sadd.s32 %s102, 1
      %s104 = scalar_select %p101, %s102, %s103
      %p107 = pneg %p101
      %p108 = scmp.eq.s32.totalorder %s28, 1
      %p109 = por %p107, %p108
      %p110 = scmp.ne.s32.totalorder %s102, %s105
      %p111 = scmp.eq.s32.totalorder %s28, 0
      %p112 = por %p110, %p111
      %p113 = scmp.ne.s32.totalorder %s102, %s105
      %p114 = scmp.eq.s32.totalorder %s33, 1
      %p115 = por %p113, %p114
      %p116 = scmp.ne.s32.totalorder %s105, %s106
      %p117 = scmp.eq.s32.totalorder %s33, 0
      %p118 = por %p116, %p117
      %p119 = scmp.ne.s32.totalorder %s105, %s106
      %p120 = scmp.eq.s32.totalorder %s34, 1
      %p121 = por %p119, %p120
      %p123 = scmp.ne.s32.totalorder %s106, %s122
      %p124 = scmp.eq.s32.totalorder %s34, 0
      %p125 = por %p123, %p124
      %s126 = ssub.s32 %s36, %s43
      %p127 = scmp.eq.s32.totalorder %s126, 0
      %s129 = sadd.s32 %s128, 1
      %s130 = scalar_select %p127, %s128, %s129
      %p133 = pneg %p127
      %p134 = scmp.eq.s32.totalorder %s28, 1
      %p135 = por %p133, %p134
      %p136 = scmp.ne.s32.totalorder %s128, %s131
      %p137 = scmp.eq.s32.totalorder %s28, 0
      %p138 = por %p136, %p137
      %p139 = scmp.ne.s32.totalorder %s128, %s131
      %p140 = scmp.eq.s32.totalorder %s33, 1
      %p141 = por %p139, %p140
      %p142 = scmp.ne.s32.totalorder %s131, %s132
      %p143 = scmp.eq.s32.totalorder %s33, 0
      %p144 = por %p142, %p143
      %p145 = scmp.ne.s32.totalorder %s131, %s132
      %p146 = scmp.eq.s32.totalorder %s34, 1
      %p147 = por %p145, %p146
      %p149 = scmp.ne.s32.totalorder %s132, %s148
      %p150 = scmp.eq.s32.totalorder %s34, 0
      %p151 = por %p149, %p150
      %s152 = ssub.s32 %s36, %s43
      %p153 = scmp.eq.s32.totalorder %s152, 0
      %s155 = sadd.s32 %s154, 1
      %s156 = scalar_select %p153, %s154, %s155
      %p159 = pneg %p153
      %p160 = scmp.eq.s32.totalorder %s28, 1
      %p161 = por %p159, %p160
      %p162 = scmp.ne.s32.totalorder %s154, %s157
      %p163 = scmp.eq.s32.totalorder %s28, 0
      %p164 = por %p162, %p163
      %p165 = scmp.ne.s32.totalorder %s154, %s157
      %p166 = scmp.eq.s32.totalorder %s33, 1
      %p167 = por %p165, %p166
      %p168 = scmp.ne.s32.totalorder %s157, %s158
      %p169 = scmp.eq.s32.totalorder %s33, 0
      %p170 = por %p168, %p169
      %p171 = scmp.ne.s32.totalorder %s157, %s158
      %p172 = scmp.eq.s32.totalorder %s34, 1
      %p173 = por %p171, %p172
      %p175 = scmp.ne.s32.totalorder %s158, %s174
      %p176 = scmp.eq.s32.totalorder %s34, 0
      %p177 = por %p175, %p176
      %s178 = ssub.s32 %s36, %s43
      %p179 = scmp.eq.s32.totalorder %s178, 0
      %s181 = sadd.s32 %s180, 1
      %s182 = scalar_select %p179, %s180, %s181
      %p185 = pneg %p179
      %p186 = scmp.eq.s32.totalorder %s28, 1
      %p187 = por %p185, %p186
      %p188 = scmp.ne.s32.totalorder %s180, %s183
      %p189 = scmp.eq.s32.totalorder %s28, 0
      %p190 = por %p188, %p189
      %p191 = scmp.ne.s32.totalorder %s180, %s183
      %p192 = scmp.eq.s32.totalorder %s33, 1
      %p193 = por %p191, %p192
      %p194 = scmp.ne.s32.totalorder %s183, %s184
      %p195 = scmp.eq.s32.totalorder %s33, 0
      %p196 = por %p194, %p195
      %p197 = scmp.ne.s32.totalorder %s183, %s184
      %p198 = scmp.eq.s32.totalorder %s34, 1
      %p199 = por %p197, %p198
      %p201 = scmp.ne.s32.totalorder %s184, %s200
      %p202 = scmp.eq.s32.totalorder %s34, 0
      %p203 = por %p201, %p202
      %s204 = ssub.s32 %s36, %s43
      %p205 = scmp.eq.s32.totalorder %s204, 0
      %s207 = sadd.s32 %s206, 1
      %s208 = scalar_select %p205, %s206, %s207
      %p211 = pneg %p205
      %p212 = scmp.eq.s32.totalorder %s28, 1
      %p213 = por %p211, %p212
      %p214 = scmp.ne.s32.totalorder %s206, %s209
      %p215 = scmp.eq.s32.totalorder %s28, 0
      %p216 = por %p214, %p215
      %p217 = scmp.ne.s32.totalorder %s206, %s209
      %p218 = scmp.eq.s32.totalorder %s33, 1
      %p219 = por %p217, %p218
      %p220 = scmp.ne.s32.totalorder %s209, %s210
      %p221 = scmp.eq.s32.totalorder %s33, 0
      %p222 = por %p220, %p221
      %p223 = scmp.ne.s32.totalorder %s209, %s210
      %p224 = scmp.eq.s32.totalorder %s34, 1
      %p225 = por %p223, %p224
      %p227 = scmp.ne.s32.totalorder %s210, %s226
      %p228 = scmp.eq.s32.totalorder %s34, 0
      %p229 = por %p227, %p228
      %s230 = ssub.s32 %s36, %s43
      %p231 = scmp.eq.s32.totalorder %s230, 0
      %s233 = sadd.s32 %s232, 1
      %s234 = scalar_select %p231, %s232, %s233
      %p237 = pneg %p231
      %p238 = scmp.eq.s32.totalorder %s28, 1
      %p239 = por %p237, %p238
      %p240 = scmp.ne.s32.totalorder %s232, %s235
      %p241 = scmp.eq.s32.totalorder %s28, 0
      %p242 = por %p240, %p241
      %p243 = scmp.ne.s32.totalorder %s232, %s235
      %p244 = scmp.eq.s32.totalorder %s33, 1
      %p245 = por %p243, %p244
      %p246 = scmp.ne.s32.totalorder %s235, %s236
      %p247 = scmp.eq.s32.totalorder %s33, 0
      %p248 = por %p246, %p247
      %p249 = scmp.ne.s32.totalorder %s235, %s236
      %p250 = scmp.eq.s32.totalorder %s34, 1
      %p251 = por %p249, %p250
      %p253 = scmp.ne.s32.totalorder %s236, %s252
      %p254 = scmp.eq.s32.totalorder %s34, 0
      %p255 = por %p253, %p254
      %s256 = ssub.s32 %s36, %s43
      %p257 = scmp.eq.s32.totalorder %s256, 0
      %s259 = sadd.s32 %s258, 1
      %s260 = scalar_select %p257, %s258, %s259
      %p263 = pneg %p257
      %p264 = scmp.eq.s32.totalorder %s28, 1
      %p265 = por %p263, %p264
      %p266 = scmp.ne.s32.totalorder %s258, %s261
      %p267 = scmp.eq.s32.totalorder %s28, 0
      %p268 = por %p266, %p267
      %p269 = scmp.ne.s32.totalorder %s258, %s261
      %p270 = scmp.eq.s32.totalorder %s33, 1
      %p271 = por %p269, %p270
      %p272 = scmp.ne.s32.totalorder %s261, %s262
      %p273 = scmp.eq.s32.totalorder %s33, 0
      %p274 = por %p272, %p273
      %p275 = scmp.ne.s32.totalorder %s261, %s262
      %p276 = scmp.eq.s32.totalorder %s34, 1
      %p277 = por %p275, %p276
      %p279 = scmp.ne.s32.totalorder %s262, %s278
      %p280 = scmp.eq.s32.totalorder %s34, 0
      %p281 = por %p279, %p280
      %s282 = ssub.s32 %s36, %s43
      %p283 = scmp.eq.s32.totalorder %s282, 0
      %s285 = sadd.s32 %s284, 1
      %s286 = scalar_select %p283, %s284, %s285
      %p289 = pneg %p283
      %p290 = scmp.eq.s32.totalorder %s28, 1
      %p291 = por %p289, %p290
      %p292 = scmp.ne.s32.totalorder %s284, %s287
      %p293 = scmp.eq.s32.totalorder %s28, 0
      %p294 = por %p292, %p293
      %p295 = scmp.ne.s32.totalorder %s284, %s287
      %p296 = scmp.eq.s32.totalorder %s33, 1
      %p297 = por %p295, %p296
      %p298 = scmp.ne.s32.totalorder %s287, %s288
      %p299 = scmp.eq.s32.totalorder %s33, 0
      %p300 = por %p298, %p299
      %p301 = scmp.ne.s32.totalorder %s287, %s288
      %p302 = scmp.eq.s32.totalorder %s34, 1
      %p303 = por %p301, %p302
      %p305 = scmp.ne.s32.totalorder %s288, %s304
      %p306 = scmp.eq.s32.totalorder %s34, 0
      %p307 = por %p305, %p306
      %s308 = ssub.s32 %s36, %s43
      %p309 = scmp.eq.s32.totalorder %s308, 0
      %s311 = sadd.s32 %s310, 1
      %s312 = scalar_select %p309, %s310, %s311
      %p315 = pneg %p309
      %p316 = scmp.eq.s32.totalorder %s28, 1
      %p317 = por %p315, %p316
      %p318 = scmp.ne.s32.totalorder %s310, %s313
      %p319 = scmp.eq.s32.totalorder %s28, 0
      %p320 = por %p318, %p319
      %p321 = scmp.ne.s32.totalorder %s310, %s313
      %p322 = scmp.eq.s32.totalorder %s33, 1
      %p323 = por %p321, %p322
      %p324 = scmp.ne.s32.totalorder %s313, %s314
      %p325 = scmp.eq.s32.totalorder %s33, 0
      %p326 = por %p324, %p325
      %p327 = scmp.ne.s32.totalorder %s313, %s314
      %p328 = scmp.eq.s32.totalorder %s34, 1
      %p329 = por %p327, %p328
      %p331 = scmp.ne.s32.totalorder %s314, %s330
      %p332 = scmp.eq.s32.totalorder %s34, 0
      %p333 = por %p331, %p332
      %s334 = ssub.s32 %s36, %s43
      %p335 = scmp.eq.s32.totalorder %s334, 0
      %s337 = sadd.s32 %s336, 1
      %s338 = scalar_select %p335, %s336, %s337
      %p341 = pneg %p335
      %p342 = scmp.eq.s32.totalorder %s28, 1
      %p343 = por %p341, %p342
      %p344 = scmp.ne.s32.totalorder %s336, %s339
      %p345 = scmp.eq.s32.totalorder %s28, 0
      %p346 = por %p344, %p345
      %p347 = scmp.ne.s32.totalorder %s336, %s339
      %p348 = scmp.eq.s32.totalorder %s33, 1
      %p349 = por %p347, %p348
      %p350 = scmp.ne.s32.totalorder %s339, %s340
      %p351 = scmp.eq.s32.totalorder %s33, 0
      %p352 = por %p350, %p351
      %p353 = scmp.ne.s32.totalorder %s339, %s340
      %p354 = scmp.eq.s32.totalorder %s34, 1
      %p355 = por %p353, %p354
      %p357 = scmp.ne.s32.totalorder %s340, %s356
      %p358 = scmp.eq.s32.totalorder %s34, 0
      %p359 = por %p357, %p358
      %s360 = ssub.s32 %s36, %s43
      %p361 = scmp.eq.s32.totalorder %s360, 0
      %s363 = sadd.s32 %s362, 1
      %s364 = scalar_select %p361, %s362, %s363
      %p367 = pneg %p361
      %p368 = scmp.eq.s32.totalorder %s28, 1
      %p369 = por %p367, %p368
      %p370 = scmp.ne.s32.totalorder %s362, %s365
      %p371 = scmp.eq.s32.totalorder %s28, 0
      %p372 = por %p370, %p371
      %p373 = scmp.ne.s32.totalorder %s362, %s365
      %p374 = scmp.eq.s32.totalorder %s33, 1
      %p375 = por %p373, %p374
      %p376 = scmp.ne.s32.totalorder %s365, %s366
      %p377 = scmp.eq.s32.totalorder %s33, 0
      %p378 = por %p376, %p377
      %p379 = scmp.ne.s32.totalorder %s365, %s366
      %p380 = scmp.eq.s32.totalorder %s34, 1
      %p381 = por %p379, %p380
      %p383 = scmp.ne.s32.totalorder %s366, %s382
      %p384 = scmp.eq.s32.totalorder %s34, 0
      %p385 = por %p383, %p384
      %s386 = ssub.s32 %s35, %s47
      %p387 = scmp.eq.s32.totalorder %s386, 0
      %s389 = sadd.s32 %s388, 1
      %s390 = scalar_select %p387, %s388, %s389
      %p393 = pneg %p387
      %p394 = scmp.eq.s32.totalorder %s28, 1
      %p395 = por %p393, %p394
      %p396 = scmp.ne.s32.totalorder %s388, %s391
      %p397 = scmp.eq.s32.totalorder %s28, 0
      %p398 = por %p396, %p397
      %p399 = scmp.ne.s32.totalorder %s388, %s391
      %p400 = scmp.eq.s32.totalorder %s33, 1
      %p401 = por %p399, %p400
      %p402 = scmp.ne.s32.totalorder %s391, %s392
      %p403 = scmp.eq.s32.totalorder %s33, 0
      %p404 = por %p402, %p403
      %p405 = scmp.ne.s32.totalorder %s391, %s392
      %p406 = scmp.eq.s32.totalorder %s34, 1
      %p407 = por %p405, %p406
      %p409 = scmp.ne.s32.totalorder %s392, %s408
      %p410 = scmp.eq.s32.totalorder %s34, 0
      %p411 = por %p409, %p410
      %p412 = scmp.le.s32.totalorder 1, %s28
      %p413 = scmp.lt.s32.totalorder %s28, 3
      %p414 = pnand %p412, %p413
      %p415 = pneg %p414
      // Predicated region
      $region9: #{transformer_decoder_forward.1} parent=5 // pred_check
        _
      $region10: #{transformer_decoder_forward.1} parent=5 // pred_check_branch
        %417 = sbr.rel (%p414) target = $region12
      $region11: #{transformer_decoder_forward.1} parent=5 // pred_region
        %s418 = ssub.s32 %s28, 1
        // Predicated region
        $region13: #{transformer_decoder_forward.1} parent=11 // pred_check
          %p419 = pneg %p66
        $region14: #{transformer_decoder_forward.1} parent=11 // pred_check_branch
          %421 = sbr.rel (%p419) target = $region16
        $region15: #{transformer_decoder_forward.1} parent=11 // pred_region
          %s422 = smul.u32 2, %s37
          %p423 = scmp.lt.s32.totalorder %s422, 1
          %s424 = scalar_select %p423, %s422, 1
          %s425 = smul.addr %s424, 8
          %s426 = scalar_lea.vmem %s0, %s425
          %s427 = smul.u32 2, %s37
        $region16: #{transformer_decoder_forward.1} parent=11 // pred_fallthru
          _
      $region12: #{transformer_decoder_forward.1} parent=5 // pred_fallthru
        _
      %p428 = scmp.lt.s32.totalorder %s28, 2
      // Predicated region
      $region17: #{transformer_decoder_forward.1} parent=5 // pred_check
        %p429 = pneg %p428
      $region18: #{transformer_decoder_forward.1} parent=5 // pred_check_branch
        %431 = sbr.rel (%p429) target = $region20
      $region19: #{transformer_decoder_forward.1} parent=5 // pred_region
        // Predicated region
        $region21: #{transformer_decoder_forward.1} parent=19 // pred_check
          %p432 = pneg %p86
        $region22: #{transformer_decoder_forward.1} parent=19 // pred_check_branch
          %434 = sbr.rel (%p432) target = $region24
        $region23: #{transformer_decoder_forward.1} parent=19 // pred_region
          %s435 = sand.u32 %s76, 1
          %s436 = scalar_lea.sflag [#allocation4], %s435
          %s437 = sand.u32 %s76, 1
          %s438 = smul.addr %s437, 192
          %s439 = scalar_lea.vmem [#allocation3], %s438
          %441 = vsyncadd %s436, 0
          %s442 = smul.addr %s36, 48
          %s443 = smul.addr %s442, 4
          %s444 = scalar_lea.hbm %s1, %s443
          %s445 = sshll.u32 %s444, 4
          %s446 = int_to_ptr.hbm [resolvable:$true] %s445
          %s447 = sshll.u32 %s439, 4
          %s448 = int_to_ptr.vmem [resolvable:$true] %s447
          %453 = dma.hbm_to_vmem [thread:$0]  %s446, 3072, %s448, %s436, 192, 192, 12
        $region24: #{transformer_decoder_forward.1} parent=19 // pred_fallthru
          _
        // Predicated region
        $region25: #{transformer_decoder_forward.1} parent=19 // pred_check
          %p454 = pneg %p112
        $region26: #{transformer_decoder_forward.1} parent=19 // pred_check_branch
          %456 = sbr.rel (%p454) target = $region28
        $region27: #{transformer_decoder_forward.1} parent=19 // pred_region
          %p457 = scmp.lt.s32.totalorder %s36, 1
          %s458 = scalar_select %p457, %s36, 1
          %s459 = smul.addr %s458, 3
          %s460 = scalar_lea.vmem %s2, %s459
        $region28: #{transformer_decoder_forward.1} parent=19 // pred_fallthru
          _
        // Predicated region
        $region29: #{transformer_decoder_forward.1} parent=19 // pred_check
          %p461 = pneg %p138
        $region30: #{transformer_decoder_forward.1} parent=19 // pred_check_branch
          %463 = sbr.rel (%p461) target = $region32
        $region31: #{transformer_decoder_forward.1} parent=19 // pred_region
          %s464 = sand.u32 %s28, 1
          %s465 = scalar_lea.sflag [#allocation6], %s464
          %s466 = sand.u32 %s128, 1
          %s467 = smul.addr %s466, 64
          %s468 = scalar_lea.vmem [#allocation5], %s467
          %470 = vsyncadd %s465, 0
          %s471 = smul.addr %s36, 16
          %s472 = smul.addr %s471, 4
          %s473 = scalar_lea.hbm %s3, %s472
          %s474 = sshll.u32 %s473, 4
          %s475 = int_to_ptr.hbm [resolvable:$true] %s474
          %s476 = sshll.u32 %s468, 4
          %s477 = int_to_ptr.vmem [resolvable:$true] %s476
          %482 = dma.hbm_to_vmem [thread:$0]  %s475, 1024, %s477, %s465, 64, 64, 4
        $region32: #{transformer_decoder_forward.1} parent=19 // pred_fallthru
          _
        // Predicated region
        $region33: #{transformer_decoder_forward.1} parent=19 // pred_check
          %p483 = pneg %p164
        $region34: #{transformer_decoder_forward.1} parent=19 // pred_check_branch
          %485 = sbr.rel (%p483) target = $region36
        $region35: #{transformer_decoder_forward.1} parent=19 // pred_region
          %p486 = scmp.lt.s32.totalorder %s36, 1
          %s487 = scalar_select %p486, %s36, 1
          %s488 = scalar_lea.vmem %s4, %s487
        $region36: #{transformer_decoder_forward.1} parent=19 // pred_fallthru
          _
        // Predicated region
        $region37: #{transformer_decoder_forward.1} parent=19 // pred_check
          %p489 = pneg %p190
        $region38: #{transformer_decoder_forward.1} parent=19 // pred_check_branch
          %491 = sbr.rel (%p489) target = $region40
        $region39: #{transformer_decoder_forward.1} parent=19 // pred_region
          %p492 = scmp.lt.s32.totalorder %s36, 1
          %s493 = scalar_select %p492, %s36, 1
          %s494 = scalar_lea.vmem %s5, %s493
        $region40: #{transformer_decoder_forward.1} parent=19 // pred_fallthru
          _
        // Predicated region
        $region41: #{transformer_decoder_forward.1} parent=19 // pred_check
          %p495 = pneg %p216
        $region42: #{transformer_decoder_forward.1} parent=19 // pred_check_branch
          %497 = sbr.rel (%p495) target = $region44
        $region43: #{transformer_decoder_forward.1} parent=19 // pred_region
          %p498 = scmp.lt.s32.totalorder %s36, 1
          %s499 = scalar_select %p498, %s36, 1
          %s500 = scalar_lea.vmem %s6, %s499
        $region44: #{transformer_decoder_forward.1} parent=19 // pred_fallthru
          _
        // Predicated region
        $region45: #{transformer_decoder_forward.1} parent=19 // pred_check
          %p501 = pneg %p242
        $region46: #{transformer_decoder_forward.1} parent=19 // pred_check_branch
          %503 = sbr.rel (%p501) target = $region48
        $region47: #{transformer_decoder_forward.1} parent=19 // pred_region
          %s504 = sand.u32 %s28, 1
          %s505 = scalar_lea.sflag [#allocation6], %s504
          %s506 = sand.u32 %s232, 1
          %s507 = smul.addr %s506, 128
          %s508 = scalar_lea.vmem [#allocation7], %s507
          %510 = vsyncadd %s505, 0
          %s511 = smul.addr %s36, 32
          %s512 = smul.addr %s511, 4
          %s513 = scalar_lea.hbm %s7, %s512
          %s514 = sshll.u32 %s513, 4
          %s515 = int_to_ptr.hbm [resolvable:$true] %s514
          %s516 = sshll.u32 %s508, 4
          %s517 = int_to_ptr.vmem [resolvable:$true] %s516
          %522 = dma.hbm_to_vmem [thread:$0]  %s515, 2048, %s517, %s505, 128, 128, 8
        $region48: #{transformer_decoder_forward.1} parent=19 // pred_fallthru
          _
        // Predicated region
        $region49: #{transformer_decoder_forward.1} parent=19 // pred_check
          %p523 = pneg %p268
        $region50: #{transformer_decoder_forward.1} parent=19 // pred_check_branch
          %525 = sbr.rel (%p523) target = $region52
        $region51: #{transformer_decoder_forward.1} parent=19 // pred_region
          %p526 = scmp.lt.s32.totalorder %s36, 1
          %s527 = scalar_select %p526, %s36, 1
          %s528 = smul.addr %s527, 2
          %s529 = scalar_lea.vmem %s8, %s528
        $region52: #{transformer_decoder_forward.1} parent=19 // pred_fallthru
          _
        // Predicated region
        $region53: #{transformer_decoder_forward.1} parent=19 // pred_check
          %p530 = pneg %p294
        $region54: #{transformer_decoder_forward.1} parent=19 // pred_check_branch
          %532 = sbr.rel (%p530) target = $region56
        $region55: #{transformer_decoder_forward.1} parent=19 // pred_region
          %s533 = sand.u32 %s284, 1
          %s534 = scalar_lea.sflag [#allocation9], %s533
          %s535 = sand.u32 %s284, 1
          %s536 = smul.addr %s535, 128
          %s537 = scalar_lea.vmem [#allocation8], %s536
          %539 = vsyncadd %s534, 0
          %s540 = smul.addr %s36, 32
          %s541 = smul.addr %s540, 4
          %s542 = scalar_lea.hbm %s9, %s541
          %s543 = sshll.u32 %s542, 4
          %s544 = int_to_ptr.hbm [resolvable:$true] %s543
          %s545 = sshll.u32 %s537, 4
          %s546 = int_to_ptr.vmem [resolvable:$true] %s545
          %551 = dma.hbm_to_vmem [thread:$0]  %s544, 2048, %s546, %s534, 64, 64, 4
        $region56: #{transformer_decoder_forward.1} parent=19 // pred_fallthru
          _
        // Predicated region
        $region57: #{transformer_decoder_forward.1} parent=19 // pred_check
          %p552 = pneg %p320
        $region58: #{transformer_decoder_forward.1} parent=19 // pred_check_branch
          %554 = sbr.rel (%p552) target = $region60
        $region59: #{transformer_decoder_forward.1} parent=19 // pred_region
          %p555 = scmp.lt.s32.totalorder %s36, 1
          %s556 = scalar_select %p555, %s36, 1
          %s557 = scalar_lea.vmem %s10, %s556
        $region60: #{transformer_decoder_forward.1} parent=19 // pred_fallthru
          _
        // Predicated region
        $region61: #{transformer_decoder_forward.1} parent=19 // pred_check
          %p558 = pneg %p346
        $region62: #{transformer_decoder_forward.1} parent=19 // pred_check_branch
          %560 = sbr.rel (%p558) target = $region64
        $region63: #{transformer_decoder_forward.1} parent=19 // pred_region
          %p561 = scmp.lt.s32.totalorder %s36, 1
          %s562 = scalar_select %p561, %s36, 1
          %s563 = scalar_lea.vmem %s11, %s562
        $region64: #{transformer_decoder_forward.1} parent=19 // pred_fallthru
          _
        // Predicated region
        $region65: #{transformer_decoder_forward.1} parent=19 // pred_check
          %p564 = pneg %p372
        $region66: #{transformer_decoder_forward.1} parent=19 // pred_check_branch
          %566 = sbr.rel (%p564) target = $region68
        $region67: #{transformer_decoder_forward.1} parent=19 // pred_region
          %p567 = scmp.lt.s32.totalorder %s36, 1
          %s568 = scalar_select %p567, %s36, 1
          %s569 = scalar_lea.vmem %s12, %s568
        $region68: #{transformer_decoder_forward.1} parent=19 // pred_fallthru
          _
      $region20: #{transformer_decoder_forward.1} parent=5 // pred_fallthru
        _
      %p570 = scmp.le.s32.totalorder 1, %s28
      %p571 = scmp.lt.s32.totalorder %s28, 3
      %p572 = pnand %p570, %p571
      %p573 = pneg %p572
      // Predicated region
      $region69: #{transformer_decoder_forward.1} parent=5 // pred_check
        _
      $region70: #{transformer_decoder_forward.1} parent=5 // pred_check_branch
        %575 = sbr.rel (%p572) target = $region72
      $region71: #{transformer_decoder_forward.1} parent=5 // pred_region
        %s576 = ssub.s32 %s28, 1
        %s577 = sand.u32 %s79, 1
        %s578 = scalar_lea.sflag [#allocation4], %s577
        %s579 = sand.u32 %s79, 1
        %s580 = smul.addr %s579, 192
        %s581 = scalar_lea.vmem [#allocation3], %s580
        // Predicated region
        $region73: #{transformer_decoder_forward.1} parent=71 // pred_check
          %p582 = pneg %p92
        $region74: #{transformer_decoder_forward.1} parent=71 // pred_check_branch
          %584 = sbr.rel (%p582) target = $region76
        $region75: #{transformer_decoder_forward.1} parent=71 // pred_region
          %586 = dma.done %s578, 3072
        $region76: #{transformer_decoder_forward.1} parent=71 // pred_fallthru
          _
        %s587 = sand.u32 %s33, 1
        %s588 = scalar_lea.sflag [#allocation6], %s587
        %s589 = sand.u32 %s131, 1
        %s590 = smul.addr %s589, 64
        %s591 = scalar_lea.vmem [#allocation5], %s590
        // Predicated region
        $region77: #{transformer_decoder_forward.1} parent=71 // pred_check
          %p592 = pneg %p144
        $region78: #{transformer_decoder_forward.1} parent=71 // pred_check_branch
          %594 = sbr.rel (%p592) target = $region80
        $region79: #{transformer_decoder_forward.1} parent=71 // pred_region
          %596 = dma.done %s588, 1024
        $region80: #{transformer_decoder_forward.1} parent=71 // pred_fallthru
          _
        %s597 = sand.u32 %s33, 1
        %s598 = scalar_lea.sflag [#allocation6], %s597
        %s599 = sand.u32 %s235, 1
        %s600 = smul.addr %s599, 128
        %s601 = scalar_lea.vmem [#allocation7], %s600
        // Predicated region
        $region81: #{transformer_decoder_forward.1} parent=71 // pred_check
          %p602 = pneg %p248
        $region82: #{transformer_decoder_forward.1} parent=71 // pred_check_branch
          %604 = sbr.rel (%p602) target = $region84
        $region83: #{transformer_decoder_forward.1} parent=71 // pred_region
          %606 = dma.done %s598, 2048
        $region84: #{transformer_decoder_forward.1} parent=71 // pred_fallthru
          _
        %s607 = sand.u32 %s287, 1
        %s608 = scalar_lea.sflag [#allocation9], %s607
        %s609 = sand.u32 %s287, 1
        %s610 = smul.addr %s609, 128
        %s611 = scalar_lea.vmem [#allocation8], %s610
        // Predicated region
        $region85: #{transformer_decoder_forward.1} parent=71 // pred_check
          %p612 = pneg %p300
        $region86: #{transformer_decoder_forward.1} parent=71 // pred_check_branch
          %614 = sbr.rel (%p612) target = $region88
        $region87: #{transformer_decoder_forward.1} parent=71 // pred_region
          %616 = dma.done %s608, 2048
        $region88: #{transformer_decoder_forward.1} parent=71 // pred_fallthru
          _
        %s617 = smul.u32 2, %s37
        %p618 = scmp.lt.s32.totalorder %s617, 1
        %s619 = scalar_select %p618, %s617, 1
        %s620 = smul.addr %s619, 8
        %s621 = scalar_lea.vmem %s0, %s620
        %p622 = pneg %p66
        %p623 = pneg %p63
        %s624 = sand.u32 %s79, 1
        %s625 = scalar_lea.sflag [#allocation4], %s624
        %s626 = sand.u32 %s79, 1
        %s627 = smul.addr %s626, 192
        %s628 = scalar_lea.vmem [#allocation3], %s627
        %p629 = pneg %p92
        %p630 = pneg %p89
        %p631 = scmp.lt.s32.totalorder %s38, 1
        %s632 = scalar_select %p631, %s38, 1
        %s633 = smul.addr %s632, 3
        %s634 = scalar_lea.vmem %s2, %s633
        %p635 = pneg %p118
        %p636 = pneg %p115
        %s637 = sand.u32 %s33, 1
        %s638 = scalar_lea.sflag [#allocation6], %s637
        %s639 = sand.u32 %s131, 1
        %s640 = smul.addr %s639, 64
        %s641 = scalar_lea.vmem [#allocation5], %s640
        %p642 = pneg %p144
        %p643 = pneg %p141
        %p644 = scmp.lt.s32.totalorder %s38, 1
        %s645 = scalar_select %p644, %s38, 1
        %s646 = scalar_lea.vmem %s4, %s645
        %p647 = pneg %p170
        %p648 = pneg %p167
        %p649 = scmp.lt.s32.totalorder %s38, 1
        %s650 = scalar_select %p649, %s38, 1
        %s651 = scalar_lea.vmem %s5, %s650
        %p652 = pneg %p196
        %p653 = pneg %p193
        %p654 = scmp.lt.s32.totalorder %s38, 1
        %s655 = scalar_select %p654, %s38, 1
        %s656 = scalar_lea.vmem %s6, %s655
        %p657 = pneg %p222
        %p658 = pneg %p219
        %s659 = sand.u32 %s33, 1
        %s660 = scalar_lea.sflag [#allocation6], %s659
        %s661 = sand.u32 %s235, 1
        %s662 = smul.addr %s661, 128
        %s663 = scalar_lea.vmem [#allocation7], %s662
        %p664 = pneg %p248
        %p665 = pneg %p245
        %p666 = scmp.lt.s32.totalorder %s38, 1
        %s667 = scalar_select %p666, %s38, 1
        %s668 = smul.addr %s667, 2
        %s669 = scalar_lea.vmem %s8, %s668
        %p670 = pneg %p274
        %p671 = pneg %p271
        %s672 = sand.u32 %s287, 1
        %s673 = scalar_lea.sflag [#allocation9], %s672
        %s674 = sand.u32 %s287, 1
        %s675 = smul.addr %s674, 128
        %s676 = scalar_lea.vmem [#allocation8], %s675
        %p677 = pneg %p300
        %p678 = pneg %p297
        %p679 = scmp.lt.s32.totalorder %s38, 1
        %s680 = scalar_select %p679, %s38, 1
        %s681 = scalar_lea.vmem %s10, %s680
        %p682 = pneg %p326
        %p683 = pneg %p323
        %p684 = scmp.lt.s32.totalorder %s38, 1
        %s685 = scalar_select %p684, %s38, 1
        %s686 = scalar_lea.vmem %s11, %s685
        %p687 = pneg %p352
        %p688 = pneg %p349
        %p689 = scmp.lt.s32.totalorder %s38, 1
        %s690 = scalar_select %p689, %s38, 1
        %s691 = scalar_lea.vmem %s12, %s690
        %p692 = pneg %p378
        %p693 = pneg %p375
        %p694 = pneg %p404
        %p695 = pneg %p401
        %s696 = smul.u32 2, %s37
        %p697 = scmp.lt.s32.totalorder %s696, 1
        %s698 = scalar_select %p697, %s696, 1
        %s699 = smul.addr %s698, 8
        %s700 = scalar_lea.vmem %s13, %s699
        %s701 = smul.u32 2, %s37
        %p702 = scmp.lt.s32.totalorder %s701, 1
        %s703 = scalar_select %p702, %s701, 1
        %s704 = smul.addr %s703, 8
        %s705 = scalar_lea.vmem %s0, %s704
        %s706 = smul.u32 2, %s37
        %p707 = scmp.lt.s32.totalorder %s38, 1
        %s708 = scalar_select %p707, %s38, 1
        %s709 = smul.addr %s708, 3
        %s710 = scalar_lea.vmem %s2, %s709
        %p711 = scmp.lt.s32.totalorder %s38, 1
        %s712 = scalar_select %p711, %s38, 1
        %s713 = scalar_lea.vmem %s4, %s712
        %p714 = scmp.lt.s32.totalorder %s38, 1
        %s715 = scalar_select %p714, %s38, 1
        %s716 = scalar_lea.vmem %s5, %s715
        %p717 = scmp.lt.s32.totalorder %s38, 1
        %s718 = scalar_select %p717, %s38, 1
        %s719 = scalar_lea.vmem %s6, %s718
        %p720 = scmp.lt.s32.totalorder %s38, 1
        %s721 = scalar_select %p720, %s38, 1
        %s722 = smul.addr %s721, 2
        %s723 = scalar_lea.vmem %s8, %s722
        %p724 = scmp.lt.s32.totalorder %s38, 1
        %s725 = scalar_select %p724, %s38, 1
        %s726 = scalar_lea.vmem %s10, %s725
        %p727 = scmp.lt.s32.totalorder %s38, 1
        %s728 = scalar_select %p727, %s38, 1
        %s729 = scalar_lea.vmem %s11, %s728
        %p730 = scmp.lt.s32.totalorder %s38, 1
        %s731 = scalar_select %p730, %s38, 1
        %s732 = scalar_lea.vmem %s12, %s731
        %s733 = smul.u32 2, %s37
        %p734 = scmp.lt.s32.totalorder %s733, 1
        %s735 = scalar_select %p734, %s733, 1
        %s736 = smul.addr %s735, 8
        %s737 = scalar_lea.vmem %s13, %s736
        %s738 = smul.u32 2, %s37
        %p740 = scmp.eq.s32.totalorder %s38, 0
        // Predicated region
        $region89: #{transformer_decoder_forward.1} parent=71 // pred_check
          %p741 = pneg %p740
        $region90: #{transformer_decoder_forward.1} parent=71 // pred_check_branch
          %743 = sbr.rel (%p741) target = $region92
        $region91: #{transformer_decoder_forward.1} parent=71 // pred_region
          %v744 = vld [vmem:[%s705] sm:$0xff]
          %v745 = vld [vmem:[%s705 + $0x8] sm:$0xff]
          %746 = vst [vmem:[#allocation2] sm:$0xff] %v744
          %747 = vst [vmem:[#allocation2 + $0x8] sm:$0xff] %v745
        $region92: #{transformer_decoder_forward.1} parent=71 // pred_fallthru
          _
        %v748 = vld [vmem:[#allocation2] sm:$0xff]
        %v749 = vld [vmem:[#allocation2 + $0x8] sm:$0xff]
        %v750 = vpack.c.bf16 %v749, %v748
        %v751 = vld [vmem:[%s581] sm:$0xff]
        %v752 = vld [vmem:[%s581 + $0x8] sm:$0xf]
        %v753 = vld [vmem:[%s581 + $0xc] sm:$0xff]
        %v754 = vld [vmem:[%s581 + $0x14] sm:$0xf]
        %v755 = vld [vmem:[%s581 + $0x18] sm:$0xff]
        %v756 = vld [vmem:[%s581 + $0x20] sm:$0xf]
        %v757 = vld [vmem:[%s581 + $0x24] sm:$0xff]
        %v758 = vld [vmem:[%s581 + $0x2c] sm:$0xf]
        %v759 = vld [vmem:[%s581 + $0x30] sm:$0xff]
        %v760 = vld [vmem:[%s581 + $0x38] sm:$0xf]
        %v761 = vld [vmem:[%s581 + $0x3c] sm:$0xff]
        %v762 = vld [vmem:[%s581 + $0x44] sm:$0xf]
        %v763 = vld [vmem:[%s581 + $0x48] sm:$0xff]
        %v764 = vld [vmem:[%s581 + $0x50] sm:$0xf]
        %v765 = vld [vmem:[%s581 + $0x54] sm:$0xff]
        %v766 = vld [vmem:[%s581 + $0x5c] sm:$0xf]
        %v767 = vld [vmem:[%s581 + $0x60] sm:$0xff]
        %v768 = vld [vmem:[%s581 + $0x68] sm:$0xf]
        %v769 = vld [vmem:[%s581 + $0x6c] sm:$0xff]
        %v770 = vld [vmem:[%s581 + $0x74] sm:$0xf]
        %v771 = vld [vmem:[%s581 + $0x78] sm:$0xff]
        %v772 = vld [vmem:[%s581 + $0x80] sm:$0xf]
        %v773 = vld [vmem:[%s581 + $0x84] sm:$0xff]
        %v774 = vld [vmem:[%s581 + $0x8c] sm:$0xf]
        %v775 = vld [vmem:[%s581 + $0x90] sm:$0xff]
        %v776 = vld [vmem:[%s581 + $0x98] sm:$0xf]
        %v777 = vld [vmem:[%s581 + $0x9c] sm:$0xff]
        %v778 = vld [vmem:[%s581 + $0xa4] sm:$0xf]
        %v779 = vld [vmem:[%s581 + $0xa8] sm:$0xff]
        %v780 = vld [vmem:[%s581 + $0xb0] sm:$0xf]
        %v781 = vld [vmem:[%s581 + $0xb4] sm:$0xff]
        %v782 = vld [vmem:[%s581 + $0xbc] sm:$0xf]
        %v815 = vunpack.c.l.b16 %v751
        %v816 = vunpack.c.h.b16 %v751
        %v817 = vunpack.c.l.b16 %v752
        %v818 = vunpack.c.l.b16 %v753
        %v819 = vunpack.c.h.b16 %v753
        %v820 = vunpack.c.l.b16 %v754
        %v821 = vunpack.c.l.b16 %v755
        %v822 = vunpack.c.h.b16 %v755
        %v823 = vunpack.c.l.b16 %v756
        %v824 = vunpack.c.l.b16 %v757
        %v825 = vunpack.c.h.b16 %v757
        %v826 = vunpack.c.l.b16 %v758
        %v827 = vunpack.c.l.b16 %v759
        %v828 = vunpack.c.h.b16 %v759
        %v829 = vunpack.c.l.b16 %v760
        %v830 = vunpack.c.l.b16 %v761
        %v831 = vunpack.c.h.b16 %v761
        %v832 = vunpack.c.l.b16 %v762
        %v833 = vunpack.c.l.b16 %v763
        %v834 = vunpack.c.h.b16 %v763
        %v835 = vunpack.c.l.b16 %v764
        %v836 = vunpack.c.l.b16 %v765
        %v837 = vunpack.c.h.b16 %v765
        %v838 = vunpack.c.l.b16 %v766
        %v839 = vunpack.c.l.b16 %v767
        %v840 = vunpack.c.h.b16 %v767
        %v841 = vunpack.c.l.b16 %v768
        %v842 = vunpack.c.l.b16 %v769
        %v843 = vunpack.c.h.b16 %v769
        %v844 = vunpack.c.l.b16 %v770
        %v845 = vunpack.c.l.b16 %v771
        %v846 = vunpack.c.h.b16 %v771
        %v847 = vunpack.c.l.b16 %v772
        %v848 = vunpack.c.l.b16 %v773
        %v849 = vunpack.c.h.b16 %v773
        %v850 = vunpack.c.l.b16 %v774
        %v851 = vunpack.c.l.b16 %v775
        %v852 = vunpack.c.h.b16 %v775
        %v853 = vunpack.c.l.b16 %v776
        %v854 = vunpack.c.l.b16 %v777
        %v855 = vunpack.c.h.b16 %v777
        %v856 = vunpack.c.l.b16 %v778
        %v857 = vunpack.c.l.b16 %v779
        %v858 = vunpack.c.h.b16 %v779
        %v859 = vunpack.c.l.b16 %v780
        %v860 = vunpack.c.l.b16 %v781
        %v861 = vunpack.c.h.b16 %v781
        %v862 = vunpack.c.l.b16 %v782
        %v863 = vpack.c.b16 %v818, %v815
        %v864 = vpack.c.b16 %v819, %v816
        %v865 = vpack.c.b16 %v820, %v817
        %v866 = vpack.c.b16 %v824, %v821
        %v867 = vpack.c.b16 %v825, %v822
        %v868 = vpack.c.b16 %v826, %v823
        %v869 = vpack.c.b16 %v830, %v827
        %v870 = vpack.c.b16 %v831, %v828
        %v871 = vpack.c.b16 %v832, %v829
        %v872 = vpack.c.b16 %v836, %v833
        %v873 = vpack.c.b16 %v837, %v834
        %v874 = vpack.c.b16 %v838, %v835
        %v875 = vpack.c.b16 %v842, %v839
        %v876 = vpack.c.b16 %v843, %v840
        %v877 = vpack.c.b16 %v844, %v841
        %v878 = vpack.c.b16 %v848, %v845
        %v879 = vpack.c.b16 %v849, %v846
        %v880 = vpack.c.b16 %v850, %v847
        %v881 = vpack.c.b16 %v854, %v851
        %v882 = vpack.c.b16 %v855, %v852
        %v883 = vpack.c.b16 %v856, %v853
        %v884 = vpack.c.b16 %v860, %v857
        %v885 = vpack.c.b16 %v861, %v858
        %v886 = vpack.c.b16 %v862, %v859
        %911 = vmatpush.bf16.msra.mxu0 %v884
        %912 = vmatpush.bf16.msra.mxu0 %v881
        %913 = vmatpush.bf16.msra.mxu0 %v878
        %914 = vmatpush.bf16.msra.mxu0 %v875
        %915 = vmatpush.bf16.msra.mxu0 %v872
        %916 = vmatpush.bf16.msra.mxu0 %v869
        %917 = vmatpush.bf16.msra.mxu0 %v866
        %918 = vmatpush.bf16.msra.mxu0 %v863
        %919 = vmatmul.bf16.gmra.mxu0 %v750
        %v920 = vpop.f32.mrf.mxu0
        %v921 = vadd.f32 0.0, %v920
        %v922 = vpop.f32.mrf.mxu0
        %v923 = vadd.f32 0.0, %v922
        %924 = vdwg.mxu0
        %925 = vmatpush.bf16.msra.mxu0 %v885
        %926 = vmatpush.bf16.msra.mxu0 %v882
        %927 = vmatpush.bf16.msra.mxu0 %v879
        %928 = vmatpush.bf16.msra.mxu0 %v876
        %929 = vmatpush.bf16.msra.mxu0 %v873
        %930 = vmatpush.bf16.msra.mxu0 %v870
        %931 = vmatpush.bf16.msra.mxu0 %v867
        %932 = vmatpush.bf16.msra.mxu0 %v864
        %933 = vmatmul.bf16.gmra.mxu0 %v750
        %v934 = vpop.f32.mrf.mxu0
        %v935 = vadd.f32 0.0, %v934
        %v936 = vpop.f32.mrf.mxu0
        %v937 = vadd.f32 0.0, %v936
        %938 = vdwg.mxu0
        %939 = vmatpush.bf16.msra.mxu0 %v886
        %940 = vmatpush.bf16.msra.mxu0 %v883
        %941 = vmatpush.bf16.msra.mxu0 %v880
        %942 = vmatpush.bf16.msra.mxu0 %v877
        %943 = vmatpush.bf16.msra.mxu0 %v874
        %944 = vmatpush.bf16.msra.mxu0 %v871
        %945 = vmatpush.bf16.msra.mxu0 %v868
        %946 = vmatpush.bf16.msra.mxu0 %v865
        %947 = vmatmul.bf16.gmra.mxu0 %v750
        %v948 = vpop.f32.mrf.mxu0
        %v949 = vadd.f32 0.0, %v948
        %v950 = vpop.f32.mrf.mxu0
        %v951 = vadd.f32 0.0, %v950
        %952 = vdwg.mxu0
        %v953 = vpack.c.bf16 %v935, %v921
        %v954 = vpack.c.bf16 %v949, %v949
        %v955 = vpack.c.bf16 %v937, %v923
        %v956 = vpack.c.bf16 %v951, %v951
        %v957 = vld [vmem:[%s710] sm:$0x7]
        %959 = vst [vmem:[#allocation1] ss:$9 sm:$0xff] %v957
        %v960 = vld [vmem:[#allocation1] sm:$0xff]
        %v961 = vld [vmem:[#allocation1 + $0x9] sm:$0xff]
        %v962 = vld [vmem:[#allocation1 + $0x12] sm:$0xff]
        %v963 = vpack.i.b16 %v960, %v960
        %v965 = vperm.slane %v963, 0
        %v966 = vpack.i.b16 %v961, %v961
        %v968 = vperm.slane %v966, 0
        %v969 = vpack.i.b16 %v962, %v962
        %v971 = vperm.slane %v969, 0
        %v972 = vunpack.c.l.bf16 %v953
        %v973 = vunpack.c.h.bf16 %v953
        %v974 = vunpack.c.l.bf16 %v954
        %v975 = vunpack.c.l.bf16 %v955
        %v976 = vunpack.c.h.bf16 %v955
        %v977 = vunpack.c.l.bf16 %v956
        %v978 = vunpack.c.l.bf16 %v965
        %v979 = vunpack.c.l.bf16 %v968
        %v980 = vunpack.c.l.bf16 %v971
        %v981 = vadd.f32 %v972, %v978
        %v982 = vadd.f32 %v973, %v979
        %v983 = vadd.f32 %v974, %v980
        %v984 = vadd.f32 %v975, %v978
        %v985 = vadd.f32 %v976, %v979
        %v986 = vadd.f32 %v977, %v980
        %v987 = vpack.c.bf16 %v982, %v981
        %v988 = vpack.c.bf16 %v983, %v983
        %v989 = vpack.c.bf16 %v985, %v984
        %v990 = vpack.c.bf16 %v986, %v986
        %v993 = vrot.slane %v987, 4
        %v994 = vrot.slane %v989, 4
        %997 = vmatpush.bf16.xpose.msra.mxu0 0
        %998 = vmatpush.bf16.xpose.msra.mxu0 0
        %999 = vmatpush.bf16.xpose.msra.mxu0 0
        %1000 = vmatpush.bf16.xpose.msra.mxu0 0
        %1001 = vmatpush.bf16.xpose.msra.mxu0 0
        %1002 = vmatpush.bf16.xpose.msra.mxu0 0
        %1003 = vmatpush.bf16.xpose.msra.mxu0 0
        %1004 = vmatpush.bf16.xpose.msra.mxu0 %v993
        %1005 = vmatmul.bf16.gmra.mxu0 %v987
        %v1006 = vpop.f32.mrf.mxu0
        %v1007 = vadd.f32 0.0, %v1006
        %v1008 = vpop.f32.mrf.mxu0
        %1009 = vdwg.mxu0
        %1010 = vmatpush.bf16.xpose.msra.mxu0 0
        %1011 = vmatpush.bf16.xpose.msra.mxu0 0
        %1012 = vmatpush.bf16.xpose.msra.mxu0 0
        %1013 = vmatpush.bf16.xpose.msra.mxu0 0
        %1014 = vmatpush.bf16.xpose.msra.mxu0 0
        %1015 = vmatpush.bf16.xpose.msra.mxu0 0
        %1016 = vmatpush.bf16.xpose.msra.mxu0 0
        %1017 = vmatpush.bf16.xpose.msra.mxu0 %v994
        %1018 = vmatmul.bf16.gmra.mxu0 %v989
        %v1019 = vpop.f32.mrf.mxu0
        %v1020 = vadd.f32 0.0, %v1019
        %v1021 = vpop.f32.mrf.mxu0
        %1022 = vdwg.mxu0
        %vm1023 = vcmask 64512
        %v1024 = vsel %vm1023, %v1007, -inf
        %1025 = vmax.xlane.f32.xlu0 %v1024
        %v1026 = vpop.xlane.xlu0 %1025
        %v1027 = vsel %vm1023, %v1020, -inf
        %1028 = vmax.xlane.f32.xlu0 %v1027
        %v1029 = vpop.xlane.xlu0 %1028
        %v1030 = vsub.f32 %v1007, %v1026
        %v1031 = vsub.f32 %v1020, %v1029
        %v1032 = vmul.f32 %v1030, 1.442695
        %v1033 = vpow.pop %v1032
        %v1034 = vmul.f32 %v1031, 1.442695
        %v1035 = vpow.pop %v1034
        %v1036 = vsel %vm1023, %v1033, 0.0
        %1037 = vadd.xlane.f32.xlu0 %v1036
        %v1038 = vpop.xlane.xlu0 %1037
        %v1039 = vsel %vm1023, %v1035, 0.0
        %1040 = vadd.xlane.f32.xlu0 %v1039
        %v1041 = vpop.xlane.xlu0 %1040
        %v1042 = vrcp.pop %v1038
        %v1043 = vrcp.pop %v1041
        %v1044 = vmul.f32 %v1033, %v1042
        %v1045 = vmul.f32 %v1035, %v1043
        %v1046 = vpack.c.bf16 %v1044, %v1044
        %v1047 = vpack.c.bf16 %v1045, %v1045
        %v1049 = vsel %vm1023, %v1046, 0
        %vm1051 = vcmask 1043456
        %v1053 = vsel %vm1051, %v988, 0
        %1055 = vmatpush.bf16.msra.mxu0 0
        %1056 = vmatpush.bf16.msra.mxu0 0
        %1057 = vmatpush.bf16.msra.mxu0 0
        %1058 = vmatpush.bf16.msra.mxu0 0
        %1059 = vmatpush.bf16.msra.mxu0 0
        %1060 = vmatpush.bf16.msra.mxu0 0
        %1061 = vmatpush.bf16.msra.mxu0 0
        %1062 = vmatpush.bf16.msra.mxu0 %v1053
        %1063 = vmatmul.bf16.gmra.mxu0 %v1049
        %v1064 = vpop.f32.mrf.mxu0
        %v1065 = vadd.f32 0.0, %v1064
        %v1066 = vpop.f32.mrf.mxu0
        %1067 = vdwg.mxu0
        %v1069 = vsel %vm1023, %v1047, 0
        %v1072 = vsel %vm1051, %v990, 0
        %1074 = vmatpush.bf16.msra.mxu0 0
        %1075 = vmatpush.bf16.msra.mxu0 0
        %1076 = vmatpush.bf16.msra.mxu0 0
        %1077 = vmatpush.bf16.msra.mxu0 0
        %1078 = vmatpush.bf16.msra.mxu0 0
        %1079 = vmatpush.bf16.msra.mxu0 0
        %1080 = vmatpush.bf16.msra.mxu0 0
        %1081 = vmatpush.bf16.msra.mxu0 %v1072
        %1082 = vmatmul.bf16.gmra.mxu0 %v1069
        %v1083 = vpop.f32.mrf.mxu0
        %v1084 = vadd.f32 0.0, %v1083
        %v1085 = vpop.f32.mrf.mxu0
        %1086 = vdwg.mxu0
        %v1087 = vpack.c.bf16 %v1084, %v1065
        %v1088 = vld [vmem:[%s591] sm:$0xf]
        %v1089 = vld [vmem:[%s591 + $0x4] sm:$0xf]
        %v1090 = vld [vmem:[%s591 + $0x8] sm:$0xf]
        %v1091 = vld [vmem:[%s591 + $0xc] sm:$0xf]
        %v1092 = vld [vmem:[%s591 + $0x10] sm:$0xf]
        %v1093 = vld [vmem:[%s591 + $0x14] sm:$0xf]
        %v1094 = vld [vmem:[%s591 + $0x18] sm:$0xf]
        %v1095 = vld [vmem:[%s591 + $0x1c] sm:$0xf]
        %v1096 = vld [vmem:[%s591 + $0x20] sm:$0xf]
        %v1097 = vld [vmem:[%s591 + $0x24] sm:$0xf]
        %v1098 = vld [vmem:[%s591 + $0x28] sm:$0xf]
        %v1099 = vld [vmem:[%s591 + $0x2c] sm:$0xf]
        %v1100 = vld [vmem:[%s591 + $0x30] sm:$0xf]
        %v1101 = vld [vmem:[%s591 + $0x34] sm:$0xf]
        %v1102 = vld [vmem:[%s591 + $0x38] sm:$0xf]
        %v1103 = vld [vmem:[%s591 + $0x3c] sm:$0xf]
        %v1104 = vld [vmem:[%s713] sm:$0x1]
        %v1106 = vperm.slane %v1104, 0
        %v1124 = vunpack.c.l.b16 %v1088
        %v1125 = vunpack.c.l.b16 %v1089
        %v1126 = vunpack.c.l.b16 %v1090
        %v1127 = vunpack.c.l.b16 %v1091
        %v1128 = vunpack.c.l.b16 %v1092
        %v1129 = vunpack.c.l.b16 %v1093
        %v1130 = vunpack.c.l.b16 %v1094
        %v1131 = vunpack.c.l.b16 %v1095
        %v1132 = vunpack.c.l.b16 %v1096
        %v1133 = vunpack.c.l.b16 %v1097
        %v1134 = vunpack.c.l.b16 %v1098
        %v1135 = vunpack.c.l.b16 %v1099
        %v1136 = vunpack.c.l.b16 %v1100
        %v1137 = vunpack.c.l.b16 %v1101
        %v1138 = vunpack.c.l.b16 %v1102
        %v1139 = vunpack.c.l.b16 %v1103
        %v1140 = vpack.c.b16 %v1125, %v1124
        %v1141 = vpack.c.b16 %v1127, %v1126
        %v1142 = vpack.c.b16 %v1129, %v1128
        %v1143 = vpack.c.b16 %v1131, %v1130
        %v1144 = vpack.c.b16 %v1133, %v1132
        %v1145 = vpack.c.b16 %v1135, %v1134
        %v1146 = vpack.c.b16 %v1137, %v1136
        %v1147 = vpack.c.b16 %v1139, %v1138
        %1156 = vmatpush.bf16.msra.mxu0 %v1147
        %1157 = vmatpush.bf16.msra.mxu0 %v1146
        %1158 = vmatpush.bf16.msra.mxu0 %v1145
        %1159 = vmatpush.bf16.msra.mxu0 %v1144
        %1160 = vmatpush.bf16.msra.mxu0 %v1143
        %1161 = vmatpush.bf16.msra.mxu0 %v1142
        %1162 = vmatpush.bf16.msra.mxu0 %v1141
        %1163 = vmatpush.bf16.msra.mxu0 %v1140
        %1164 = vmatmul.bf16.gmra.mxu0 %v1087
        %v1165 = vpop.f32.mrf.mxu0
        %v1166 = vadd.f32 %v1106, %v1165
        %v1167 = vpop.f32.mrf.mxu0
        %v1168 = vadd.f32 %v1106, %v1167
        %1169 = vdwg.mxu0
        %v1170 = vadd.f32 %v748, %v1166
        %v1171 = vadd.f32 %v749, %v1168
        %v1172 = vld [vmem:[%s716] sm:$0x1]
        %v1173 = vld [vmem:[%s719] sm:$0x1]
        %1174 = vadd.xlane.f32.xlu0 %v1170
        %v1175 = vpop.xlane.xlu0 %1174
        %1176 = vadd.xlane.f32.xlu0 %v1171
        %v1177 = vpop.xlane.xlu0 %1176
        %v1178 = vrcp.pop 128.0
        %v1179 = vmul.f32 128.0, %v1178
        %v1180 = vsub.f32 1.0, %v1179
        %v1181 = vmul.f32 %v1178, %v1180
        %v1182 = vadd.f32 %v1178, %v1181
        %vm1183 = vweird.f32 %v1178
        %v1184 = vsel %vm1183, %v1178, %v1182
        %v1185 = vmul.f32 %v1175, %v1184
        %v1186 = vmul.f32 %v1177, %v1184
        %v1187 = vsub.f32 %v1170, %v1185
        %v1188 = vsub.f32 %v1171, %v1186
        %v1189 = vmul.f32 %v1187, %v1187
        %v1190 = vmul.f32 %v1188, %v1188
        %1191 = vadd.xlane.f32.xlu0 %v1189
        %v1192 = vpop.xlane.xlu0 %1191
        %1193 = vadd.xlane.f32.xlu0 %v1190
        %v1194 = vpop.xlane.xlu0 %1193
        %v1195 = vmul.f32 %v1192, %v1184
        %v1196 = vmul.f32 %v1194, %v1184
        %v1197 = vadd.f32 %v1195, 1e-05
        %v1198 = vadd.f32 %v1196, 1e-05
        %v1199 = vrsqrt.pop %v1197
        %v1200 = vmul.f32 %v1199, %v1197
        %v1201 = vmul.f32 %v1200, %v1199
        %v1202 = vmul.f32 0.5, %v1201
        %v1203 = vsub.f32 1.5, %v1202
        %v1204 = vmul.f32 %v1199, %v1203
        %vm1205 = vweird.f32 %v1197
        %vm1206 = vweird.f32 %v1199
        %vm1207 = vmor %vm1205, %vm1206
        %v1208 = vsel %vm1207, %v1199, %v1204
        %v1209 = vrsqrt.pop %v1198
        %v1210 = vmul.f32 %v1209, %v1198
        %v1211 = vmul.f32 %v1210, %v1209
        %v1212 = vmul.f32 0.5, %v1211
        %v1213 = vsub.f32 1.5, %v1212
        %v1214 = vmul.f32 %v1209, %v1213
        %vm1215 = vweird.f32 %v1198
        %vm1216 = vweird.f32 %v1209
        %vm1217 = vmor %vm1215, %vm1216
        %v1218 = vsel %vm1217, %v1209, %v1214
        %v1219 = vmul.f32 %v1187, %v1208
        %v1220 = vmul.f32 %v1188, %v1218
        %v1222 = vperm.slane %v1172, 0
        %v1224 = vmul.f32 %v1219, %v1222
        %v1225 = vmul.f32 %v1220, %v1222
        %v1227 = vperm.slane %v1173, 0
        %v1229 = vadd.f32 %v1224, %v1227
        %v1230 = vadd.f32 %v1225, %v1227
        %v1231 = vpack.c.bf16 %v1230, %v1229
        %v1232 = vld [vmem:[%s601] sm:$0xff]
        %v1233 = vld [vmem:[%s601 + $0x8] sm:$0xff]
        %v1234 = vld [vmem:[%s601 + $0x10] sm:$0xff]
        %v1235 = vld [vmem:[%s601 + $0x18] sm:$0xff]
        %v1236 = vld [vmem:[%s601 + $0x20] sm:$0xff]
        %v1237 = vld [vmem:[%s601 + $0x28] sm:$0xff]
        %v1238 = vld [vmem:[%s601 + $0x30] sm:$0xff]
        %v1239 = vld [vmem:[%s601 + $0x38] sm:$0xff]
        %v1240 = vld [vmem:[%s601 + $0x40] sm:$0xff]
        %v1241 = vld [vmem:[%s601 + $0x48] sm:$0xff]
        %v1242 = vld [vmem:[%s601 + $0x50] sm:$0xff]
        %v1243 = vld [vmem:[%s601 + $0x58] sm:$0xff]
        %v1244 = vld [vmem:[%s601 + $0x60] sm:$0xff]
        %v1245 = vld [vmem:[%s601 + $0x68] sm:$0xff]
        %v1246 = vld [vmem:[%s601 + $0x70] sm:$0xff]
        %v1247 = vld [vmem:[%s601 + $0x78] sm:$0xff]
        %v1248 = vld [vmem:[%s723] sm:$0x3]
        %v1250 = vperm.slane %v1248, 0
        %v1251 = vperm.slane %v1248, 1
        %v1270 = vunpack.c.l.b16 %v1232
        %v1271 = vunpack.c.h.b16 %v1232
        %v1272 = vunpack.c.l.b16 %v1233
        %v1273 = vunpack.c.h.b16 %v1233
        %v1274 = vunpack.c.l.b16 %v1234
        %v1275 = vunpack.c.h.b16 %v1234
        %v1276 = vunpack.c.l.b16 %v1235
        %v1277 = vunpack.c.h.b16 %v1235
        %v1278 = vunpack.c.l.b16 %v1236
        %v1279 = vunpack.c.h.b16 %v1236
        %v1280 = vunpack.c.l.b16 %v1237
        %v1281 = vunpack.c.h.b16 %v1237
        %v1282 = vunpack.c.l.b16 %v1238
        %v1283 = vunpack.c.h.b16 %v1238
        %v1284 = vunpack.c.l.b16 %v1239
        %v1285 = vunpack.c.h.b16 %v1239
        %v1286 = vunpack.c.l.b16 %v1240
        %v1287 = vunpack.c.h.b16 %v1240
        %v1288 = vunpack.c.l.b16 %v1241
        %v1289 = vunpack.c.h.b16 %v1241
        %v1290 = vunpack.c.l.b16 %v1242
        %v1291 = vunpack.c.h.b16 %v1242
        %v1292 = vunpack.c.l.b16 %v1243
        %v1293 = vunpack.c.h.b16 %v1243
        %v1294 = vunpack.c.l.b16 %v1244
        %v1295 = vunpack.c.h.b16 %v1244
        %v1296 = vunpack.c.l.b16 %v1245
        %v1297 = vunpack.c.h.b16 %v1245
        %v1298 = vunpack.c.l.b16 %v1246
        %v1299 = vunpack.c.h.b16 %v1246
        %v1300 = vunpack.c.l.b16 %v1247
        %v1301 = vunpack.c.h.b16 %v1247
        %v1302 = vpack.c.b16 %v1272, %v1270
        %v1303 = vpack.c.b16 %v1273, %v1271
        %v1304 = vpack.c.b16 %v1276, %v1274
        %v1305 = vpack.c.b16 %v1277, %v1275
        %v1306 = vpack.c.b16 %v1280, %v1278
        %v1307 = vpack.c.b16 %v1281, %v1279
        %v1308 = vpack.c.b16 %v1284, %v1282
        %v1309 = vpack.c.b16 %v1285, %v1283
        %v1310 = vpack.c.b16 %v1288, %v1286
        %v1311 = vpack.c.b16 %v1289, %v1287
        %v1312 = vpack.c.b16 %v1292, %v1290
        %v1313 = vpack.c.b16 %v1293, %v1291
        %v1314 = vpack.c.b16 %v1296, %v1294
        %v1315 = vpack.c.b16 %v1297, %v1295
        %v1316 = vpack.c.b16 %v1300, %v1298
        %v1317 = vpack.c.b16 %v1301, %v1299
        %1334 = vmatpush.bf16.msra.mxu0 %v1316
        %1335 = vmatpush.bf16.msra.mxu0 %v1314
        %1336 = vmatpush.bf16.msra.mxu0 %v1312
        %1337 = vmatpush.bf16.msra.mxu0 %v1310
        %1338 = vmatpush.bf16.msra.mxu0 %v1308
        %1339 = vmatpush.bf16.msra.mxu0 %v1306
        %1340 = vmatpush.bf16.msra.mxu0 %v1304
        %1341 = vmatpush.bf16.msra.mxu0 %v1302
        %1342 = vmatmul.bf16.gmra.mxu0 %v1231
        %v1343 = vpop.f32.mrf.mxu0
        %v1344 = vadd.f32 %v1250, %v1343
        %v1345 = vpop.f32.mrf.mxu0
        %v1346 = vadd.f32 %v1250, %v1345
        %1347 = vdwg.mxu0
        %1348 = vmatpush.bf16.msra.mxu0 %v1317
        %1349 = vmatpush.bf16.msra.mxu0 %v1315
        %1350 = vmatpush.bf16.msra.mxu0 %v1313
        %1351 = vmatpush.bf16.msra.mxu0 %v1311
        %1352 = vmatpush.bf16.msra.mxu0 %v1309
        %1353 = vmatpush.bf16.msra.mxu0 %v1307
        %1354 = vmatpush.bf16.msra.mxu0 %v1305
        %1355 = vmatpush.bf16.msra.mxu0 %v1303
        %1356 = vmatmul.bf16.gmra.mxu0 %v1231
        %v1357 = vpop.f32.mrf.mxu0
        %v1358 = vadd.f32 %v1251, %v1357
        %v1359 = vpop.f32.mrf.mxu0
        %v1360 = vadd.f32 %v1251, %v1359
        %1361 = vdwg.mxu0
        %v1362 = vmax.f32 %v1344, 0.0
        %v1363 = vmax.f32 %v1358, 0.0
        %v1364 = vmax.f32 %v1346, 0.0
        %v1365 = vmax.f32 %v1360, 0.0
        %v1366 = vpack.c.bf16 %v1364, %v1362
        %v1367 = vpack.c.bf16 %v1365, %v1363
        %v1368 = vld [vmem:[%s611] sm:$0xf]
        %v1369 = vld [vmem:[%s611 + $0x4] sm:$0xf]
        %v1370 = vld [vmem:[%s611 + $0x8] sm:$0xf]
        %v1371 = vld [vmem:[%s611 + $0xc] sm:$0xf]
        %v1372 = vld [vmem:[%s611 + $0x10] sm:$0xf]
        %v1373 = vld [vmem:[%s611 + $0x14] sm:$0xf]
        %v1374 = vld [vmem:[%s611 + $0x18] sm:$0xf]
        %v1375 = vld [vmem:[%s611 + $0x1c] sm:$0xf]
        %v1376 = vld [vmem:[%s611 + $0x20] sm:$0xf]
        %v1377 = vld [vmem:[%s611 + $0x24] sm:$0xf]
        %v1378 = vld [vmem:[%s611 + $0x28] sm:$0xf]
        %v1379 = vld [vmem:[%s611 + $0x2c] sm:$0xf]
        %v1380 = vld [vmem:[%s611 + $0x30] sm:$0xf]
        %v1381 = vld [vmem:[%s611 + $0x34] sm:$0xf]
        %v1382 = vld [vmem:[%s611 + $0x38] sm:$0xf]
        %v1383 = vld [vmem:[%s611 + $0x3c] sm:$0xf]
        %v1384 = vld [vmem:[%s611 + $0x40] sm:$0xf]
        %v1385 = vld [vmem:[%s611 + $0x44] sm:$0xf]
        %v1386 = vld [vmem:[%s611 + $0x48] sm:$0xf]
        %v1387 = vld [vmem:[%s611 + $0x4c] sm:$0xf]
        %v1388 = vld [vmem:[%s611 + $0x50] sm:$0xf]
        %v1389 = vld [vmem:[%s611 + $0x54] sm:$0xf]
        %v1390 = vld [vmem:[%s611 + $0x58] sm:$0xf]
        %v1391 = vld [vmem:[%s611 + $0x5c] sm:$0xf]
        %v1392 = vld [vmem:[%s611 + $0x60] sm:$0xf]
        %v1393 = vld [vmem:[%s611 + $0x64] sm:$0xf]
        %v1394 = vld [vmem:[%s611 + $0x68] sm:$0xf]
        %v1395 = vld [vmem:[%s611 + $0x6c] sm:$0xf]
        %v1396 = vld [vmem:[%s611 + $0x70] sm:$0xf]
        %v1397 = vld [vmem:[%s611 + $0x74] sm:$0xf]
        %v1398 = vld [vmem:[%s611 + $0x78] sm:$0xf]
        %v1399 = vld [vmem:[%s611 + $0x7c] sm:$0xf]
        %v1400 = vld [vmem:[%s726] sm:$0x1]
        %v1402 = vperm.slane %v1400, 0
        %v1436 = vunpack.c.l.b16 %v1368
        %v1437 = vunpack.c.l.b16 %v1369
        %v1438 = vunpack.c.l.b16 %v1370
        %v1439 = vunpack.c.l.b16 %v1371
        %v1440 = vunpack.c.l.b16 %v1372
        %v1441 = vunpack.c.l.b16 %v1373
        %v1442 = vunpack.c.l.b16 %v1374
        %v1443 = vunpack.c.l.b16 %v1375
        %v1444 = vunpack.c.l.b16 %v1376
        %v1445 = vunpack.c.l.b16 %v1377
        %v1446 = vunpack.c.l.b16 %v1378
        %v1447 = vunpack.c.l.b16 %v1379
        %v1448 = vunpack.c.l.b16 %v1380
        %v1449 = vunpack.c.l.b16 %v1381
        %v1450 = vunpack.c.l.b16 %v1382
        %v1451 = vunpack.c.l.b16 %v1383
        %v1452 = vunpack.c.l.b16 %v1384
        %v1453 = vunpack.c.l.b16 %v1385
        %v1454 = vunpack.c.l.b16 %v1386
        %v1455 = vunpack.c.l.b16 %v1387
        %v1456 = vunpack.c.l.b16 %v1388
        %v1457 = vunpack.c.l.b16 %v1389
        %v1458 = vunpack.c.l.b16 %v1390
        %v1459 = vunpack.c.l.b16 %v1391
        %v1460 = vunpack.c.l.b16 %v1392
        %v1461 = vunpack.c.l.b16 %v1393
        %v1462 = vunpack.c.l.b16 %v1394
        %v1463 = vunpack.c.l.b16 %v1395
        %v1464 = vunpack.c.l.b16 %v1396
        %v1465 = vunpack.c.l.b16 %v1397
        %v1466 = vunpack.c.l.b16 %v1398
        %v1467 = vunpack.c.l.b16 %v1399
        %v1468 = vpack.c.b16 %v1437, %v1436
        %v1469 = vpack.c.b16 %v1439, %v1438
        %v1470 = vpack.c.b16 %v1441, %v1440
        %v1471 = vpack.c.b16 %v1443, %v1442
        %v1472 = vpack.c.b16 %v1445, %v1444
        %v1473 = vpack.c.b16 %v1447, %v1446
        %v1474 = vpack.c.b16 %v1449, %v1448
        %v1475 = vpack.c.b16 %v1451, %v1450
        %v1476 = vpack.c.b16 %v1453, %v1452
        %v1477 = vpack.c.b16 %v1455, %v1454
        %v1478 = vpack.c.b16 %v1457, %v1456
        %v1479 = vpack.c.b16 %v1459, %v1458
        %v1480 = vpack.c.b16 %v1461, %v1460
        %v1481 = vpack.c.b16 %v1463, %v1462
        %v1482 = vpack.c.b16 %v1465, %v1464
        %v1483 = vpack.c.b16 %v1467, %v1466
        %1500 = vmatpush.bf16.msra.mxu0 %v1475
        %1501 = vmatpush.bf16.msra.mxu0 %v1474
        %1502 = vmatpush.bf16.msra.mxu0 %v1473
        %1503 = vmatpush.bf16.msra.mxu0 %v1472
        %1504 = vmatpush.bf16.msra.mxu0 %v1471
        %1505 = vmatpush.bf16.msra.mxu0 %v1470
        %1506 = vmatpush.bf16.msra.mxu0 %v1469
        %1507 = vmatpush.bf16.msra.mxu0 %v1468
        %1508 = vmatmul.bf16.gmra.mxu0 %v1366
        %v1509 = vpop.f32.mrf.mxu0
        %v1510 = vadd.f32 %v1402, %v1509
        %v1511 = vpop.f32.mrf.mxu0
        %v1512 = vadd.f32 %v1402, %v1511
        %1513 = vdwg.mxu0
        %1514 = vmatpush.bf16.msra.mxu0 %v1483
        %1515 = vmatpush.bf16.msra.mxu0 %v1482
        %1516 = vmatpush.bf16.msra.mxu0 %v1481
        %1517 = vmatpush.bf16.msra.mxu0 %v1480
        %1518 = vmatpush.bf16.msra.mxu0 %v1479
        %1519 = vmatpush.bf16.msra.mxu0 %v1478
        %1520 = vmatpush.bf16.msra.mxu0 %v1477
        %1521 = vmatpush.bf16.msra.mxu0 %v1476
        %1522 = vmatmul.bf16.gmra.mxu0 %v1367
        %v1523 = vpop.f32.mrf.mxu0
        %v1524 = vadd.f32 %v1510, %v1523
        %v1525 = vpop.f32.mrf.mxu0
        %v1526 = vadd.f32 %v1512, %v1525
        %1527 = vdwg.mxu0
        %v1528 = vadd.f32 %v1229, %v1524
        %v1529 = vadd.f32 %v1230, %v1526
        %v1530 = vld [vmem:[%s729] sm:$0x1]
        %v1531 = vld [vmem:[%s732] sm:$0x1]
        %1532 = vadd.xlane.f32.xlu0 %v1528
        %v1533 = vpop.xlane.xlu0 %1532
        %1534 = vadd.xlane.f32.xlu0 %v1529
        %v1535 = vpop.xlane.xlu0 %1534
        %v1536 = vmul.f32 %v1533, %v1184
        %v1537 = vmul.f32 %v1535, %v1184
        %v1538 = vsub.f32 %v1528, %v1536
        %v1539 = vsub.f32 %v1529, %v1537
        %v1540 = vmul.f32 %v1538, %v1538
        %v1541 = vmul.f32 %v1539, %v1539
        %1542 = vadd.xlane.f32.xlu0 %v1540
        %v1543 = vpop.xlane.xlu0 %1542
        %1544 = vadd.xlane.f32.xlu0 %v1541
        %v1545 = vpop.xlane.xlu0 %1544
        %v1546 = vmul.f32 %v1543, %v1184
        %v1547 = vmul.f32 %v1545, %v1184
        %v1548 = vadd.f32 %v1546, 1e-05
        %v1549 = vadd.f32 %v1547, 1e-05
        %v1550 = vrsqrt.pop %v1548
        %v1551 = vmul.f32 %v1550, %v1548
        %v1552 = vmul.f32 %v1551, %v1550
        %v1553 = vmul.f32 0.5, %v1552
        %v1554 = vsub.f32 1.5, %v1553
        %v1555 = vmul.f32 %v1550, %v1554
        %vm1556 = vweird.f32 %v1548
        %vm1557 = vweird.f32 %v1550
        %vm1558 = vmor %vm1556, %vm1557
        %v1559 = vsel %vm1558, %v1550, %v1555
        %v1560 = vrsqrt.pop %v1549
        %v1561 = vmul.f32 %v1560, %v1549
        %v1562 = vmul.f32 %v1561, %v1560
        %v1563 = vmul.f32 0.5, %v1562
        %v1564 = vsub.f32 1.5, %v1563
        %v1565 = vmul.f32 %v1560, %v1564
        %vm1566 = vweird.f32 %v1549
        %vm1567 = vweird.f32 %v1560
        %vm1568 = vmor %vm1566, %vm1567
        %v1569 = vsel %vm1568, %v1560, %v1565
        %v1570 = vmul.f32 %v1538, %v1559
        %v1571 = vmul.f32 %v1539, %v1569
        %v1573 = vperm.slane %v1530, 0
        %v1575 = vmul.f32 %v1570, %v1573
        %v1576 = vmul.f32 %v1571, %v1573
        %v1578 = vperm.slane %v1531, 0
        %v1580 = vadd.f32 %v1575, %v1578
        %v1581 = vadd.f32 %v1576, %v1578
        %1582 = vst [vmem:[#allocation2] sm:$0xff] %v1580
        %1583 = vst [vmem:[#allocation2 + $0x8] sm:$0xff] %v1581
        %p1584 = scmp.eq.s32.totalorder %s38, 1
        // Predicated region
        $region93: #{transformer_decoder_forward.1} parent=71 // pred_check
          %p1585 = pneg %p1584
        $region94: #{transformer_decoder_forward.1} parent=71 // pred_check_branch
          %1587 = sbr.rel (%p1585) target = $region96
        $region95: #{transformer_decoder_forward.1} parent=71 // pred_region
          %1588 = vst [vmem:[%s737] sm:$0xff] %v1580
          %1589 = vst [vmem:[%s737 + $0x8] sm:$0xff] %v1581
        $region96: #{transformer_decoder_forward.1} parent=71 // pred_fallthru
          _
        %s1590 = smul.u32 2, %s37
        %p1591 = scmp.lt.s32.totalorder %s1590, 1
        %s1592 = scalar_select %p1591, %s1590, 1
        %s1593 = smul.addr %s1592, 8
        %s1594 = scalar_lea.vmem %s13, %s1593
        // Predicated region
        $region97: #{transformer_decoder_forward.1} parent=71 // pred_check
          %p1595 = pneg %p401
        $region98: #{transformer_decoder_forward.1} parent=71 // pred_check_branch
          %1597 = sbr.rel (%p1595) target = $region100
        $region99: #{transformer_decoder_forward.1} parent=71 // pred_region
          %s1598 = smul.u32 2, %s37
        $region100: #{transformer_decoder_forward.1} parent=71 // pred_fallthru
          _
        // Predicated region
        $region101: #{transformer_decoder_forward.1} parent=71 // pred_check
          %p1599 = pneg %p401
        $region102: #{transformer_decoder_forward.1} parent=71 // pred_check_branch
          %1601 = sbr.rel (%p1599) target = $region104
        $region103: #{transformer_decoder_forward.1} parent=71 // pred_region
          %s1602 = smul.u32 2, %s37
          %p1603 = scmp.lt.s32.totalorder %s1602, 1
          %s1604 = scalar_select %p1603, %s1602, 1
          %s1605 = smul.addr %s1604, 8
          %s1606 = scalar_lea.vmem %s13, %s1605
        $region104: #{transformer_decoder_forward.1} parent=71 // pred_fallthru
          _
      $region72: #{transformer_decoder_forward.1} parent=5 // pred_fallthru
        _
      %p1607 = scmp.le.s32.totalorder 2, %s28
      // Predicated region
      $region105: #{transformer_decoder_forward.1} parent=5 // pred_check
        %p1608 = pneg %p1607
      $region106: #{transformer_decoder_forward.1} parent=5 // pred_check_branch
        %1610 = sbr.rel (%p1608) target = $region108
      $region107: #{transformer_decoder_forward.1} parent=5 // pred_region
        %s1611 = ssub.s32 %s28, 2
      $region108: #{transformer_decoder_forward.1} parent=5 // pred_fallthru
        _
    $region6: #{transformer_decoder_forward.1} parent=1 // loop_footer
      %s32 = sadd.s32 1, %s28
    $region7: #{transformer_decoder_forward.1} parent=1 // loop_footer_branch
      %27 = sbr.rel target = $region3
    $region8: #{transformer_decoder_forward.1} parent=1 // loop_exit
      _
    %1612 = vsyncpa [#allocation4], 1
    %s1613 = scalar_lea.sflag [#allocation4], 1
    %1614 = vsyncpa %s1613, 1
    %1615 = vsyncpa [#allocation6], 1
    %s1616 = scalar_lea.sflag [#allocation6], 1
    %1617 = vsyncpa %s1616, 1
    %1618 = vsyncpa [#allocation9], 1
    %s1619 = scalar_lea.sflag [#allocation9], 1
    %1620 = vsyncpa %s1619, 1

</llo_original>
